<compile_context>
chip_gen: v5e
topology: v5e:2x2
jax: 0.10.0
libtpu: 0.0.40
codegen_flags: <defaults>
</compile_context>

<pallas_src>
import jax
import jax.numpy as jnp
from jax.experimental import pallas as pl
from jax.experimental.pallas import tpu as pltpu


# ----------------------------------------------------------------------------
# Pallas kernel: fused 3x3 conv (no bias), NHWC, row tile + 2-row halo.
# ----------------------------------------------------------------------------
def _conv3x3_kernel(xm_ref, xh_ref, w_ref, o_ref):
    # xm_ref: (1, TH, Wp, Cin)   main padded rows of this tile
    # xh_ref: (1, 2,  Wp, Cin)   2-row halo just below the main slab
    # w_ref : (9, Cin, Cout)     tap-major matmul weights, tap = 3*dy + dx
    # o_ref : (1, TH, W, Cout)
    th, _, cin = xm_ref.shape[1], xm_ref.shape[2], xm_ref.shape[3]
    w_out = o_ref.shape[2]
    cout = o_ref.shape[3]

    xs = jnp.concatenate([xm_ref[0], xh_ref[0]], axis=0)       # (TH+2, Wp, Cin)

    acc = jnp.zeros((th * w_out, cout), jnp.float32)
    for dy in range(3):
        for dx in range(3):
            xt = xs[dy:dy + th, dx:dx + w_out, :].reshape(th * w_out, cin)
            acc = acc + jnp.dot(xt, w_ref[3 * dy + dx],
                                preferred_element_type=jnp.float32)

    o_ref[0] = acc.reshape(th, w_out, cout).astype(o_ref.dtype)


# ----------------------------------------------------------------------------
# Wrapper
# ----------------------------------------------------------------------------
def _pick_row_tile(h, wp, cin, itemsize, vmem_budget=2 * 1024 * 1024):
    """Largest even row tile whose input slab stays under ~vmem_budget bytes."""
    cap = max(2, min(h + (h % 2), vmem_budget // max(1, wp * cin * itemsize)))
    cap -= cap % 2
    cap = max(cap, 2)
    for th in range(cap, 1, -2):          # prefer an exact (even) divisor of h
        if h % th == 0:
            return th
    return cap                            # otherwise pad H up to a multiple


def upsample_pallas(x_nchw, weight_oihw):
    """x: (B, C, H, W), weight: (C, C, 3, 3) (OIHW).  Returns (B, C//4, 2H, 2W)."""
    b, cin, h, w = x_nchw.shape
    cout = weight_oihw.shape[0]
    assert cout % 4 == 0, "PixelShuffle(2) needs conv out-channels % 4 == 0"

    # NCHW -> NHWC + conv zero-padding (+ optional bottom row padding), one XLA pass.
    x_nhwc = jnp.transpose(x_nchw, (0, 2, 3, 1))
    wp = w + 2
    th = _pick_row_tile(h, wp, cin, x_nchw.dtype.itemsize)
    n_t = pl.cdiv(h, th)
    h_pad = n_t * th
    xp = jnp.pad(x_nhwc, ((0, 0), (1, 1 + (h_pad - h)), (1, 1), (0, 0)))

    # Tap-major matmul weights: wmat[3*dy+dx, ci, co] = weight[co, ci, dy, dx].
    wmat = jnp.transpose(weight_oihw, (2, 3, 1, 0)).reshape(9, cin, cout)

    conv = pl.pallas_call(
        _conv3x3_kernel,
        out_shape=jax.ShapeDtypeStruct((b, h_pad, w, cout), x_nchw.dtype),
        grid=(b, n_t),
        in_specs=[
            # main rows [t*TH, t*TH + TH) of the padded image
            pl.BlockSpec((1, th, wp, cin), lambda i, t: (i, t, 0, 0)),
            # 2-row halo [ (t+1)*TH, (t+1)*TH + 2 ) of the SAME padded image
            pl.BlockSpec((1, 2, wp, cin),
                         lambda i, t, _th=th: (i, (t + 1) * (_th // 2), 0, 0)),
            # weights, resident
            pl.BlockSpec((9, cin, cout), lambda i, t: (0, 0, 0)),
        ],
        out_specs=pl.BlockSpec((1, th, w, cout), lambda i, t: (i, t, 0, 0)),
        compiler_params=pltpu.CompilerParams(
            dimension_semantics=("parallel", "parallel")),
    )(xp, xp, wmat)

    # PixelShuffle(2): channels are in PyTorch order co = 4c + 2i + j, so this
    # is one transpose; the reshapes around it are free row-major merges.
    conv = conv[:, :h]                                   # drop row padding (no-op here)
    c_ps = cout // 4
    y = conv.reshape(b, h, w, c_ps, 2, 2)                # [b, h, w, c, i, j]
    y = jnp.transpose(y, (0, 3, 1, 4, 2, 5))             # [b, c, h, i, w, j]
    return y.reshape(b, c_ps, 2 * h, 2 * w)


# ----------------------------------------------------------------------------
# Pure-JAX reference (lax conv + pixel shuffle) for a correctness check.
# ----------------------------------------------------------------------------
def upsample_ref(x_nchw, weight_oihw):
    y = jax.lax.conv_general_dilated(
        x_nchw, weight_oihw, window_strides=(1, 1), padding="SAME",
        dimension_numbers=("NCHW", "OIHW", "NCHW"),
        precision=jax.lax.Precision.HIGHEST)
    b, c4, h, w = y.shape
    c = c4 // 4
    y = y.reshape(b, c, 2, 2, h, w)                      # [b, c, i, j, h, w]
    y = jnp.transpose(y, (0, 1, 4, 2, 5, 3))             # [b, c, h, i, w, j]
    return y.reshape(b, c, 2 * h, 2 * w)


if __name__ == "__main__":
    B, C, H, W = 2, 48, 16, 16            # n_feat = 48 (module default)
    key = jax.random.PRNGKey(0)
    kx, kw = jax.random.split(key)
    x = jax.random.normal(kx, (B, C, H, W), jnp.float32)
    wconv = jax.random.normal(kw, (C, C, 3, 3), jnp.float32) / jnp.sqrt(C * 9.0)

    fwd = jax.jit(upsample_pallas)
    out = jax.block_until_ready(fwd(x, wconv))
    assert out.shape == (B, C // 4, 2 * H, 2 * W) and out.dtype == jnp.float32

    ref = upsample_ref(x, wconv)
    err = float(jnp.max(jnp.abs(out - ref)))
    assert err < 5e-2, f"max abs err vs reference too large: {err}"
    print("KERNEL_OK")
</pallas_src>

<mosaic_0001>
module attributes {stable_mosaic.version = 11 : i64} {
  func.func @_conv3x3_kernel(%arg0: i32, %arg1: i32, %arg2: memref<1x16x18x48xf32, #tpu.memory_space<vmem>>, %arg3: memref<1x2x18x48xf32, #tpu.memory_space<vmem>>, %arg4: memref<9x48x48xf32, #tpu.memory_space<vmem>>, %arg5: memref<1x16x16x48xf32, #tpu.memory_space<vmem>>) attributes {dimension_semantics = [#tpu.dimension_semantics<parallel>, #tpu.dimension_semantics<parallel>], iteration_bounds = array<i64: 2, 1>, scalar_prefetch = 0 : i64, scratch_operands = 0 : i64, tpu.core_type = #tpu.core_type<tc>, window_params = [{transform_indices = @transform_0, window_bounds = array<i64: 1, 16, 18, 48>}, {transform_indices = @transform_1, window_bounds = array<i64: 1, 2, 18, 48>}, {pipeline_mode = #tpu.pipeline_mode<synchronous>, transform_indices = @transform_2, window_bounds = array<i64: 9, 48, 48>}, {transform_indices = @transform_3, window_bounds = array<i64: 1, 16, 16, 48>}]} {
    %c0 = arith.constant 0 : index
    %c0_0 = arith.constant 0 : index
    %c0_1 = arith.constant 0 : index
    %c0_2 = arith.constant 0 : index
    %0 = vector.load %arg2[%c0, %c0_0, %c0_1, %c0_2] : memref<1x16x18x48xf32, #tpu.memory_space<vmem>>, vector<1x16x18x48xf32>
    %1 = vector.shape_cast %0 : vector<1x16x18x48xf32> to vector<16x18x48xf32>
    %c0_3 = arith.constant 0 : index
    %c0_4 = arith.constant 0 : index
    %c0_5 = arith.constant 0 : index
    %c0_6 = arith.constant 0 : index
    %2 = vector.load %arg3[%c0_3, %c0_4, %c0_5, %c0_6] : memref<1x2x18x48xf32, #tpu.memory_space<vmem>>, vector<1x2x18x48xf32>
    %3 = vector.shape_cast %2 : vector<1x2x18x48xf32> to vector<2x18x48xf32>
    %4 = tpu.concatenate %1, %3 in 0 : vector<16x18x48xf32>, vector<2x18x48xf32> -> vector<18x18x48xf32>
    %cst = arith.constant 0.000000e+00 : f32
    %5 = vector.broadcast %cst : f32 to vector<256x48xf32>
    %6 = vector.extract_strided_slice %4 {offsets = [0, 0, 0], sizes = [16, 16, 48], strides = [1, 1, 1]} : vector<18x18x48xf32> to vector<16x16x48xf32>
    %7 = vector.shape_cast %6 : vector<16x16x48xf32> to vector<256x48xf32>
    %c0_7 = arith.constant 0 : index
    %c0_8 = arith.constant 0 : index
    %c0_9 = arith.constant 0 : index
    %8 = vector.load %arg4[%c0_7, %c0_8, %c0_9] : memref<9x48x48xf32, #tpu.memory_space<vmem>>, vector<1x48x48xf32>
    %9 = vector.shape_cast %8 : vector<1x48x48xf32> to vector<48x48xf32>
    %cst_10 = arith.constant dense<0.000000e+00> : vector<256x48xf32>
    %10 = tpu.matmul %7, %9, %cst_10 {dimension_numbers = #tpu.dot_dimension_numbers<[1], [0], [0], [1], [0, 0, 1, 1], [], []>} : vector<256x48xf32>, vector<48x48xf32>, vector<256x48xf32> -> vector<256x48xf32>
    %11 = arith.addf %5, %10 : vector<256x48xf32>
    %12 = vector.extract_strided_slice %4 {offsets = [0, 1, 0], sizes = [16, 16, 48], strides = [1, 1, 1]} : vector<18x18x48xf32> to vector<16x16x48xf32>
    %13 = vector.shape_cast %12 : vector<16x16x48xf32> to vector<256x48xf32>
    %c1 = arith.constant 1 : index
    %c0_11 = arith.constant 0 : index
    %c0_12 = arith.constant 0 : index
    %14 = vector.load %arg4[%c1, %c0_11, %c0_12] : memref<9x48x48xf32, #tpu.memory_space<vmem>>, vector<1x48x48xf32>
    %15 = vector.shape_cast %14 : vector<1x48x48xf32> to vector<48x48xf32>
    %cst_13 = arith.constant dense<0.000000e+00> : vector<256x48xf32>
    %16 = tpu.matmul %13, %15, %cst_13 {dimension_numbers = #tpu.dot_dimension_numbers<[1], [0], [0], [1], [0, 0, 1, 1], [], []>} : vector<256x48xf32>, vector<48x48xf32>, vector<256x48xf32> -> vector<256x48xf32>
    %17 = arith.addf %11, %16 : vector<256x48xf32>
    %18 = vector.extract_strided_slice %4 {offsets = [0, 2, 0], sizes = [16, 16, 48], strides = [1, 1, 1]} : vector<18x18x48xf32> to vector<16x16x48xf32>
    %19 = vector.shape_cast %18 : vector<16x16x48xf32> to vector<256x48xf32>
    %c2 = arith.constant 2 : index
    %c0_14 = arith.constant 0 : index
    %c0_15 = arith.constant 0 : index
    %20 = vector.load %arg4[%c2, %c0_14, %c0_15] : memref<9x48x48xf32, #tpu.memory_space<vmem>>, vector<1x48x48xf32>
    %21 = vector.shape_cast %20 : vector<1x48x48xf32> to vector<48x48xf32>
    %cst_16 = arith.constant dense<0.000000e+00> : vector<256x48xf32>
    %22 = tpu.matmul %19, %21, %cst_16 {dimension_numbers = #tpu.dot_dimension_numbers<[1], [0], [0], [1], [0, 0, 1, 1], [], []>} : vector<256x48xf32>, vector<48x48xf32>, vector<256x48xf32> -> vector<256x48xf32>
    %23 = arith.addf %17, %22 : vector<256x48xf32>
    %24 = vector.extract_strided_slice %4 {offsets = [1, 0, 0], sizes = [16, 16, 48], strides = [1, 1, 1]} : vector<18x18x48xf32> to vector<16x16x48xf32>
    %25 = vector.shape_cast %24 : vector<16x16x48xf32> to vector<256x48xf32>
    %c3 = arith.constant 3 : index
    %c0_17 = arith.constant 0 : index
    %c0_18 = arith.constant 0 : index
    %26 = vector.load %arg4[%c3, %c0_17, %c0_18] : memref<9x48x48xf32, #tpu.memory_space<vmem>>, vector<1x48x48xf32>
    %27 = vector.shape_cast %26 : vector<1x48x48xf32> to vector<48x48xf32>
    %cst_19 = arith.constant dense<0.000000e+00> : vector<256x48xf32>
    %28 = tpu.matmul %25, %27, %cst_19 {dimension_numbers = #tpu.dot_dimension_numbers<[1], [0], [0], [1], [0, 0, 1, 1], [], []>} : vector<256x48xf32>, vector<48x48xf32>, vector<256x48xf32> -> vector<256x48xf32>
    %29 = arith.addf %23, %28 : vector<256x48xf32>
    %30 = vector.extract_strided_slice %4 {offsets = [1, 1, 0], sizes = [16, 16, 48], strides = [1, 1, 1]} : vector<18x18x48xf32> to vector<16x16x48xf32>
    %31 = vector.shape_cast %30 : vector<16x16x48xf32> to vector<256x48xf32>
    %c4 = arith.constant 4 : index
    %c0_20 = arith.constant 0 : index
    %c0_21 = arith.constant 0 : index
    %32 = vector.load %arg4[%c4, %c0_20, %c0_21] : memref<9x48x48xf32, #tpu.memory_space<vmem>>, vector<1x48x48xf32>
    %33 = vector.shape_cast %32 : vector<1x48x48xf32> to vector<48x48xf32>
    %cst_22 = arith.constant dense<0.000000e+00> : vector<256x48xf32>
    %34 = tpu.matmul %31, %33, %cst_22 {dimension_numbers = #tpu.dot_dimension_numbers<[1], [0], [0], [1], [0, 0, 1, 1], [], []>} : vector<256x48xf32>, vector<48x48xf32>, vector<256x48xf32> -> vector<256x48xf32>
    %35 = arith.addf %29, %34 : vector<256x48xf32>
    %36 = vector.extract_strided_slice %4 {offsets = [1, 2, 0], sizes = [16, 16, 48], strides = [1, 1, 1]} : vector<18x18x48xf32> to vector<16x16x48xf32>
    %37 = vector.shape_cast %36 : vector<16x16x48xf32> to vector<256x48xf32>
    %c5 = arith.constant 5 : index
    %c0_23 = arith.constant 0 : index
    %c0_24 = arith.constant 0 : index
    %38 = vector.load %arg4[%c5, %c0_23, %c0_24] : memref<9x48x48xf32, #tpu.memory_space<vmem>>, vector<1x48x48xf32>
    %39 = vector.shape_cast %38 : vector<1x48x48xf32> to vector<48x48xf32>
    %cst_25 = arith.constant dense<0.000000e+00> : vector<256x48xf32>
    %40 = tpu.matmul %37, %39, %cst_25 {dimension_numbers = #tpu.dot_dimension_numbers<[1], [0], [0], [1], [0, 0, 1, 1], [], []>} : vector<256x48xf32>, vector<48x48xf32>, vector<256x48xf32> -> vector<256x48xf32>
    %41 = arith.addf %35, %40 : vector<256x48xf32>
    %42 = vector.extract_strided_slice %4 {offsets = [2, 0, 0], sizes = [16, 16, 48], strides = [1, 1, 1]} : vector<18x18x48xf32> to vector<16x16x48xf32>
    %43 = vector.shape_cast %42 : vector<16x16x48xf32> to vector<256x48xf32>
    %c6 = arith.constant 6 : index
    %c0_26 = arith.constant 0 : index
    %c0_27 = arith.constant 0 : index
    %44 = vector.load %arg4[%c6, %c0_26, %c0_27] : memref<9x48x48xf32, #tpu.memory_space<vmem>>, vector<1x48x48xf32>
    %45 = vector.shape_cast %44 : vector<1x48x48xf32> to vector<48x48xf32>
    %cst_28 = arith.constant dense<0.000000e+00> : vector<256x48xf32>
    %46 = tpu.matmul %43, %45, %cst_28 {dimension_numbers = #tpu.dot_dimension_numbers<[1], [0], [0], [1], [0, 0, 1, 1], [], []>} : vector<256x48xf32>, vector<48x48xf32>, vector<256x48xf32> -> vector<256x48xf32>
    %47 = arith.addf %41, %46 : vector<256x48xf32>
    %48 = vector.extract_strided_slice %4 {offsets = [2, 1, 0], sizes = [16, 16, 48], strides = [1, 1, 1]} : vector<18x18x48xf32> to vector<16x16x48xf32>
    %49 = vector.shape_cast %48 : vector<16x16x48xf32> to vector<256x48xf32>
    %c7 = arith.constant 7 : index
    %c0_29 = arith.constant 0 : index
    %c0_30 = arith.constant 0 : index
    %50 = vector.load %arg4[%c7, %c0_29, %c0_30] : memref<9x48x48xf32, #tpu.memory_space<vmem>>, vector<1x48x48xf32>
    %51 = vector.shape_cast %50 : vector<1x48x48xf32> to vector<48x48xf32>
    %cst_31 = arith.constant dense<0.000000e+00> : vector<256x48xf32>
    %52 = tpu.matmul %49, %51, %cst_31 {dimension_numbers = #tpu.dot_dimension_numbers<[1], [0], [0], [1], [0, 0, 1, 1], [], []>} : vector<256x48xf32>, vector<48x48xf32>, vector<256x48xf32> -> vector<256x48xf32>
    %53 = arith.addf %47, %52 : vector<256x48xf32>
    %54 = vector.extract_strided_slice %4 {offsets = [2, 2, 0], sizes = [16, 16, 48], strides = [1, 1, 1]} : vector<18x18x48xf32> to vector<16x16x48xf32>
    %55 = vector.shape_cast %54 : vector<16x16x48xf32> to vector<256x48xf32>
    %c8 = arith.constant 8 : index
    %c0_32 = arith.constant 0 : index
    %c0_33 = arith.constant 0 : index
    %56 = vector.load %arg4[%c8, %c0_32, %c0_33] : memref<9x48x48xf32, #tpu.memory_space<vmem>>, vector<1x48x48xf32>
    %57 = vector.shape_cast %56 : vector<1x48x48xf32> to vector<48x48xf32>
    %cst_34 = arith.constant dense<0.000000e+00> : vector<256x48xf32>
    %58 = tpu.matmul %55, %57, %cst_34 {dimension_numbers = #tpu.dot_dimension_numbers<[1], [0], [0], [1], [0, 0, 1, 1], [], []>} : vector<256x48xf32>, vector<48x48xf32>, vector<256x48xf32> -> vector<256x48xf32>
    %59 = arith.addf %53, %58 : vector<256x48xf32>
    %60 = vector.shape_cast %59 : vector<256x48xf32> to vector<16x16x48xf32>
    %c0_35 = arith.constant 0 : index
    %c0_36 = arith.constant 0 : index
    %c0_37 = arith.constant 0 : index
    %c0_38 = arith.constant 0 : index
    %61 = vector.load %arg5[%c0_35, %c0_36, %c0_37, %c0_38] : memref<1x16x16x48xf32, #tpu.memory_space<vmem>>, vector<1x16x16x48xf32>
    %62 = vector.shape_cast %61 : vector<1x16x16x48xf32> to vector<16x16x48xf32>
    %63 = vector.shape_cast %60 : vector<16x16x48xf32> to vector<1x16x16x48xf32>
    tpu.vector_store %arg5[%c0_35, %c0_36, %c0_37, %c0_38], %63 {strides = array<i32>} : memref<1x16x16x48xf32, #tpu.memory_space<vmem>>, vector<1x16x16x48xf32>,
    return
  }
  func.func @transform_0(%arg0: i32, %arg1: i32) -> (i32, i32, i32, i32) {
    %c0_i32 = arith.constant 0 : i32
    %c0_i32_0 = arith.constant 0 : i32
    %c0_i32_1 = arith.constant 0 : i32
    return %arg0, %arg1, %c0_i32, %c0_i32_0 : i32, i32, i32, i32
  }
  func.func @transform_1(%arg0: i32, %arg1: i32) -> (i32, i32, i32, i32) {
    %c1_i32 = arith.constant 1 : i32
    %0 = arith.addi %arg1, %c1_i32 : i32
    %c8_i32 = arith.constant 8 : i32
    %1 = arith.muli %0, %c8_i32 : i32
    %c0_i32 = arith.constant 0 : i32
    %c0_i32_0 = arith.constant 0 : i32
    %c0_i32_1 = arith.constant 0 : i32
    return %arg0, %1, %c0_i32, %c0_i32_0 : i32, i32, i32, i32
  }
  func.func @transform_2(%arg0: i32, %arg1: i32) -> (i32, i32, i32) {
    %c0_i32 = arith.constant 0 : i32
    %c0_i32_0 = arith.constant 0 : i32
    %c0_i32_1 = arith.constant 0 : i32
    %c0_i32_2 = arith.constant 0 : i32
    return %c0_i32, %c0_i32_0, %c0_i32_1 : i32, i32, i32
  }
  func.func @transform_3(%arg0: i32, %arg1: i32) -> (i32, i32, i32, i32) {
    %c0_i32 = arith.constant 0 : i32
    %c0_i32_0 = arith.constant 0 : i32
    %c0_i32_1 = arith.constant 0 : i32
    return %arg0, %arg1, %c0_i32, %c0_i32_0 : i32, i32, i32, i32
  }
}

</mosaic_0001>

<llo_original>
// kernel: upsample_pallas.1
$region0: #{upsample_pallas.1}
  #allocation0 [shape = 'u32[]', space=smem, size = 0x4, offset = 0x4, fixed_abs, tag = 'smem constant byte address 0x4 - core index']
  #allocation1 [shape = 'u32[72,128]{1,0:T(1,128)}', space=vmem, size = 0x9000, scoped, tag = 'internal scratch']
  %s0 = inlined_call_operand.vmem [shape: f32[2,18,18,48], index: 0, kind: input, shape index: {}, may-alias: {0,1}]
  %s1 = inlined_call_operand.vmem [shape: f32[2,18,18,48], index: 1, kind: input, shape index: {}, may-alias: {0,1}]
  %s2 = inlined_call_operand.vmem [shape: f32[9,48,48], index: 2, kind: input, shape index: {}]
  %s3 = inlined_call_operand.vmem [shape: f32[2,16,16,48], index: 3, kind: output, shape index: {}]
  %s4 = sld [smem:[#allocation0]]
  $region45: #{upsample_pallas.1} parent=0
    _
  %s6 = ssub.s32 1, %s4
  %s7 = scalar_select 0, %s6, %s4
  loop: start=0, step=1, limit=4
  $region2: #{upsample_pallas.1} parent=0 // loop_pre_header
    _
  $region3: #{upsample_pallas.1} parent=0 // loop_header
    %s9 = sphi 0, %s13
    %p10 = scmp.ge.s32.totalorder %s9, 4
    %s16 = sphi 0, %s28
    %s17 = sphi 0, %s24
    %s18 = sphi 0, %s16
    %s19 = sphi 0, %s17
    %s20 = sphi 0, %s18
    %s21 = sphi 0, %s19
    %s33 = sphi 0, %s35
    %s36 = sphi 0, %s33
    %s37 = sphi 0, %s36
    %s53 = sphi 0, %s37
    %s65 = sphi 0, %s67
    %s68 = sphi 0, %s65
    %s69 = sphi 0, %s68
    %s85 = sphi 0, %s69
    %s89 = sphi 0, %s89
    %s91 = sphi 0, %s89
    %s92 = sphi 0, %s91
    %s106 = sphi 0, %s92
    %s114 = sphi 0, %s116
    %s117 = sphi 0, %s114
    %s118 = sphi 0, %s117
    %s134 = sphi 0, %s118
  $region4: #{upsample_pallas.1} parent=0 // loop_header_branch
    %12 = sbr.rel (%p10) target = $region8
  $region5: #{upsample_pallas.1} parent=0 // loop_body
    %s14 = ssub.s32 %s9, 1
    %s15 = ssub.s32 %s9, 2
    %s22 = sadd.s32 1, %s17
    %p23 = scmp.ge.s32.totalorder %s22, 1
    %s24 = scalar_select %p23, 0, %s22
    %s25 = sadd.s32 1, %s16
    %s26 = scalar_select %p23, %s25, %s16
    %p27 = scmp.ge.s32.totalorder %s26, 2
    %s28 = scalar_select %p27, 0, %s26
    %s29 = ssub.s32 %s16, %s28
    %s30 = ssub.s32 %s17, %s24
    %s31 = sor.u32 %s29, %s30
    %p32 = scmp.eq.s32.totalorder %s31, 0
    %s34 = sadd.s32 %s33, 1
    %s35 = scalar_select %p32, %s33, %s34
    %p38 = pneg %p32
    %p39 = scmp.eq.s32.totalorder %s9, 1
    %p40 = por %p38, %p39
    %p41 = scmp.ne.s32.totalorder %s33, %s36
    %p42 = scmp.eq.s32.totalorder %s9, 0
    %p43 = por %p41, %p42
    %p44 = scmp.ne.s32.totalorder %s33, %s36
    %p45 = scmp.eq.s32.totalorder %s14, 1
    %p46 = por %p44, %p45
    %p47 = scmp.ne.s32.totalorder %s36, %s37
    %p48 = scmp.eq.s32.totalorder %s14, 0
    %p49 = por %p47, %p48
    %p50 = scmp.ne.s32.totalorder %s36, %s37
    %p51 = scmp.eq.s32.totalorder %s15, 1
    %p52 = por %p50, %p51
    %p54 = scmp.ne.s32.totalorder %s37, %s53
    %p55 = scmp.eq.s32.totalorder %s15, 0
    %p56 = por %p54, %p55
    %s57 = sadd.s32 %s17, 1
    %s58 = smul.u32 %s57, 8
    %s59 = sadd.s32 %s24, 1
    %s60 = smul.u32 %s59, 8
    %s61 = ssub.s32 %s16, %s28
    %s62 = ssub.s32 %s58, %s60
    %s63 = sor.u32 %s61, %s62
    %p64 = scmp.eq.s32.totalorder %s63, 0
    %s66 = sadd.s32 %s65, 1
    %s67 = scalar_select %p64, %s65, %s66
    %p70 = pneg %p64
    %p71 = scmp.eq.s32.totalorder %s9, 1
    %p72 = por %p70, %p71
    %p73 = scmp.ne.s32.totalorder %s65, %s68
    %p74 = scmp.eq.s32.totalorder %s9, 0
    %p75 = por %p73, %p74
    %p76 = scmp.ne.s32.totalorder %s65, %s68
    %p77 = scmp.eq.s32.totalorder %s14, 1
    %p78 = por %p76, %p77
    %p79 = scmp.ne.s32.totalorder %s68, %s69
    %p80 = scmp.eq.s32.totalorder %s14, 0
    %p81 = por %p79, %p80
    %p82 = scmp.ne.s32.totalorder %s68, %s69
    %p83 = scmp.eq.s32.totalorder %s15, 1
    %p84 = por %p82, %p83
    %p86 = scmp.ne.s32.totalorder %s69, %s85
    %p87 = scmp.eq.s32.totalorder %s15, 0
    %p88 = por %p86, %p87
    %s90 = sadd.s32 %s89, 1
    %p93 = scmp.eq.s32.totalorder %s9, 1
    %p94 = scmp.ne.s32.totalorder %s89, %s91
    %p95 = scmp.eq.s32.totalorder %s9, 0
    %p96 = por %p94, %p95
    %p97 = scmp.ne.s32.totalorder %s89, %s91
    %p98 = scmp.eq.s32.totalorder %s14, 1
    %p99 = por %p97, %p98
    %p100 = scmp.ne.s32.totalorder %s91, %s92
    %p101 = scmp.eq.s32.totalorder %s14, 0
    %p102 = por %p100, %p101
    %p103 = scmp.ne.s32.totalorder %s91, %s92
    %p104 = scmp.eq.s32.totalorder %s15, 1
    %p105 = por %p103, %p104
    %p107 = scmp.ne.s32.totalorder %s92, %s106
    %p108 = scmp.eq.s32.totalorder %s15, 0
    %p109 = por %p107, %p108
    %s110 = ssub.s32 %s16, %s28
    %s111 = ssub.s32 %s17, %s24
    %s112 = sor.u32 %s110, %s111
    %p113 = scmp.eq.s32.totalorder %s112, 0
    %s115 = sadd.s32 %s114, 1
    %s116 = scalar_select %p113, %s114, %s115
    %p119 = pneg %p113
    %p120 = scmp.eq.s32.totalorder %s9, 1
    %p121 = por %p119, %p120
    %p122 = scmp.ne.s32.totalorder %s114, %s117
    %p123 = scmp.eq.s32.totalorder %s9, 0
    %p124 = por %p122, %p123
    %p125 = scmp.ne.s32.totalorder %s114, %s117
    %p126 = scmp.eq.s32.totalorder %s14, 1
    %p127 = por %p125, %p126
    %p128 = scmp.ne.s32.totalorder %s117, %s118
    %p129 = scmp.eq.s32.totalorder %s14, 0
    %p130 = por %p128, %p129
    %p131 = scmp.ne.s32.totalorder %s117, %s118
    %p132 = scmp.eq.s32.totalorder %s15, 1
    %p133 = por %p131, %p132
    %p135 = scmp.ne.s32.totalorder %s118, %s134
    %p136 = scmp.eq.s32.totalorder %s15, 0
    %p137 = por %p135, %p136
    %p138 = scmp.le.s32.totalorder 1, %s9
    %p139 = scmp.lt.s32.totalorder %s9, 3
    %p140 = pnand %p138, %p139
    %p141 = pneg %p140
    // Predicated region
    $region9: #{upsample_pallas.1} parent=5 // pred_check
      _
    $region10: #{upsample_pallas.1} parent=5 // pred_check_branch
      %143 = sbr.rel (%p140) target = $region12
    $region11: #{upsample_pallas.1} parent=5 // pred_region
      %s144 = ssub.s32 %s9, 1
      // Predicated region
      $region13: #{upsample_pallas.1} parent=11 // pred_check
        %p145 = pneg %p102
      $region14: #{upsample_pallas.1} parent=11 // pred_check_branch
        %147 = sbr.rel (%p145) target = $region16
      $region15: #{upsample_pallas.1} parent=11 // pred_region
        _
      $region16: #{upsample_pallas.1} parent=11 // pred_fallthru
        _
    $region12: #{upsample_pallas.1} parent=5 // pred_fallthru
      _
    %p148 = scmp.lt.s32.totalorder %s9, 2
    // Predicated region
    $region17: #{upsample_pallas.1} parent=5 // pred_check
      %p149 = pneg %p148
    $region18: #{upsample_pallas.1} parent=5 // pred_check_branch
      %151 = sbr.rel (%p149) target = $region20
    $region19: #{upsample_pallas.1} parent=5 // pred_region
      // Predicated region
      $region21: #{upsample_pallas.1} parent=19 // pred_check
        %p152 = pneg %p43
      $region22: #{upsample_pallas.1} parent=19 // pred_check_branch
        %154 = sbr.rel (%p152) target = $region24
      $region23: #{upsample_pallas.1} parent=19 // pred_region
        %s155 = smul.u32 16, %s17
        %s156 = ssub.s32 18, %s155
        %p157 = scmp.lt.s32.totalorder %s156, 16
        %s158 = scalar_select %p157, %s156, 16
        %s159 = smul.u32 8, %s158
        %s160 = smul.u32 %s159, 3
        %p161 = scmp.lt.s32.totalorder %s16, 1
        %s162 = scalar_select %p161, %s16, 1
        %p163 = scmp.lt.s32.totalorder %s155, 17
        %s164 = scalar_select %p163, %s155, 17
        %s165 = smul.addr %s164, 3
        %s166 = smul.addr %s162, 54
        %s167 = sadd.s32 %s165, %s166
        %s168 = smul.addr %s167, 8
        %s169 = scalar_lea.vmem %s0, %s168
        %s170 = smul.u32 16, %s17
        %s171 = ssub.s32 18, %s170
        %p172 = scmp.lt.s32.totalorder %s171, 16
        %s173 = scalar_select %p172, %s171, 16
        %s174 = smul.u32 8, %s173
        %s175 = smul.u32 %s174, 3
      $region24: #{upsample_pallas.1} parent=19 // pred_fallthru
        _
      // Predicated region
      $region25: #{upsample_pallas.1} parent=19 // pred_check
        %p176 = pneg %p75
      $region26: #{upsample_pallas.1} parent=19 // pred_check_branch
        %178 = sbr.rel (%p176) target = $region28
      $region27: #{upsample_pallas.1} parent=19 // pred_region
        %s179 = sadd.s32 %s17, 1
        %s180 = smul.u32 %s179, 8
        %s181 = smul.u32 2, %s180
        %p182 = scmp.lt.s32.totalorder %s16, 1
        %s183 = scalar_select %p182, %s16, 1
        %p184 = scmp.lt.s32.totalorder %s181, 17
        %s185 = scalar_select %p184, %s181, 17
        %s186 = smul.addr %s185, 3
        %s187 = smul.addr %s183, 54
        %s188 = sadd.s32 %s186, %s187
        %s189 = smul.addr %s188, 8
        %s190 = scalar_lea.vmem %s1, %s189
        %s191 = sadd.s32 %s17, 1
        %s192 = smul.u32 %s191, 8
        %s193 = smul.u32 2, %s192
      $region28: #{upsample_pallas.1} parent=19 // pred_fallthru
        _
    $region20: #{upsample_pallas.1} parent=5 // pred_fallthru
      _
    %p194 = scmp.le.s32.totalorder 1, %s9
    %p195 = scmp.lt.s32.totalorder %s9, 3
    %p196 = pnand %p194, %p195
    %p197 = pneg %p196
    // Predicated region
    $region29: #{upsample_pallas.1} parent=5 // pred_check
      _
    $region30: #{upsample_pallas.1} parent=5 // pred_check_branch
      %199 = sbr.rel (%p196) target = $region32
    $region31: #{upsample_pallas.1} parent=5 // pred_region
      %s200 = ssub.s32 %s9, 1
      %s201 = smul.u32 16, %s19
      %s202 = ssub.s32 18, %s201
      %p203 = scmp.lt.s32.totalorder %s202, 16
      %s204 = scalar_select %p203, %s202, 16
      %s205 = smul.u32 8, %s204
      %s206 = smul.u32 %s205, 3
      %p207 = scmp.lt.s32.totalorder %s18, 1
      %s208 = scalar_select %p207, %s18, 1
      %p209 = scmp.lt.s32.totalorder %s201, 17
      %s210 = scalar_select %p209, %s201, 17
      %s211 = smul.addr %s210, 3
      %s212 = smul.addr %s208, 54
      %s213 = sadd.s32 %s211, %s212
      %s214 = smul.addr %s213, 8
      %s215 = scalar_lea.vmem %s0, %s214
      %p216 = pneg %p49
      %p217 = pneg %p46
      %s218 = sadd.s32 %s19, 1
      %s219 = smul.u32 %s218, 8
      %s220 = smul.u32 2, %s219
      %p221 = scmp.lt.s32.totalorder %s18, 1
      %s222 = scalar_select %p221, %s18, 1
      %p223 = scmp.lt.s32.totalorder %s220, 17
      %s224 = scalar_select %p223, %s220, 17
      %s225 = smul.addr %s224, 3
      %s226 = smul.addr %s222, 54
      %s227 = sadd.s32 %s225, %s226
      %s228 = smul.addr %s227, 8
      %s229 = scalar_lea.vmem %s1, %s228
      %p230 = pneg %p81
      %p231 = pneg %p78
      %p232 = pneg %p102
      %p233 = pneg %p99
      %p234 = pneg %p130
      %p235 = pneg %p127
      %s236 = smul.u32 16, %s19
      %p237 = scmp.lt.s32.totalorder %s18, 1
      %s238 = scalar_select %p237, %s18, 1
      %p239 = scmp.lt.s32.totalorder %s236, 15
      %s240 = scalar_select %p239, %s236, 15
      %s241 = smul.addr %s240, 2
      %s242 = smul.addr %s238, 32
      %s243 = sadd.s32 %s241, %s242
      %s244 = smul.addr %s243, 8
      %s245 = scalar_lea.vmem %s3, %s244
      %s246 = smul.u32 16, %s19
      %s247 = ssub.s32 18, %s246
      %p248 = scmp.lt.s32.totalorder %s247, 16
      %s249 = scalar_select %p248, %s247, 16
      %s250 = smul.u32 8, %s249
      %s251 = smul.u32 %s250, 3
      %p252 = scmp.lt.s32.totalorder %s18, 1
      %s253 = scalar_select %p252, %s18, 1
      %p254 = scmp.lt.s32.totalorder %s246, 17
      %s255 = scalar_select %p254, %s246, 17
      %s256 = smul.addr %s255, 3
      %s257 = smul.addr %s253, 54
      %s258 = sadd.s32 %s256, %s257
      %s259 = smul.addr %s258, 8
      %s260 = scalar_lea.vmem %s0, %s259
      %s261 = smul.u32 16, %s19
      %s262 = ssub.s32 18, %s261
      %p263 = scmp.lt.s32.totalorder %s262, 16
      %s264 = scalar_select %p263, %s262, 16
      %s265 = smul.u32 8, %s264
      %s266 = smul.u32 %s265, 3
      %s267 = sadd.s32 %s19, 1
      %s268 = smul.u32 %s267, 8
      %s269 = smul.u32 2, %s268
      %p270 = scmp.lt.s32.totalorder %s18, 1
      %s271 = scalar_select %p270, %s18, 1
      %p272 = scmp.lt.s32.totalorder %s269, 17
      %s273 = scalar_select %p272, %s269, 17
      %s274 = smul.addr %s273, 3
      %s275 = smul.addr %s271, 54
      %s276 = sadd.s32 %s274, %s275
      %s277 = smul.addr %s276, 8
      %s278 = scalar_lea.vmem %s1, %s277
      %s279 = sadd.s32 %s19, 1
      %s280 = smul.u32 %s279, 8
      %s281 = smul.u32 2, %s280
      %s282 = smul.u32 16, %s19
      %p283 = scmp.lt.s32.totalorder %s18, 1
      %s284 = scalar_select %p283, %s18, 1
      %p285 = scmp.lt.s32.totalorder %s282, 15
      %s286 = scalar_select %p285, %s282, 15
      %s287 = smul.addr %s286, 2
      %s288 = smul.addr %s284, 32
      %s289 = sadd.s32 %s287, %s288
      %s290 = smul.addr %s289, 8
      %s291 = scalar_lea.vmem %s3, %s290
      %s292 = smul.u32 16, %s19
      %v293 = vld [vmem:[%s260] sm:$0xff]
      %v294 = vld [vmem:[%s260 + $0x8] sm:$0xff]
      %v295 = vld [vmem:[%s260 + $0x10] sm:$0x3]
      %v296 = vld [vmem:[%s260 + $0x18] sm:$0xff]
      %v297 = vld [vmem:[%s260 + $0x20] sm:$0xff]
      %v298 = vld [vmem:[%s260 + $0x28] sm:$0x3]
      %v299 = vld [vmem:[%s260 + $0x30] sm:$0xff]
      %v300 = vld [vmem:[%s260 + $0x38] sm:$0xff]
      %v301 = vld [vmem:[%s260 + $0x40] sm:$0x3]
      %v302 = vld [vmem:[%s260 + $0x48] sm:$0xff]
      %v303 = vld [vmem:[%s260 + $0x50] sm:$0xff]
      %v304 = vld [vmem:[%s260 + $0x58] sm:$0x3]
      %v305 = vld [vmem:[%s260 + $0x60] sm:$0xff]
      %v306 = vld [vmem:[%s260 + $0x68] sm:$0xff]
      %v307 = vld [vmem:[%s260 + $0x70] sm:$0x3]
      %v308 = vld [vmem:[%s260 + $0x78] sm:$0xff]
      %v309 = vld [vmem:[%s260 + $0x80] sm:$0xff]
      %v310 = vld [vmem:[%s260 + $0x88] sm:$0x3]
      %v311 = vld [vmem:[%s260 + $0x90] sm:$0xff]
      %v312 = vld [vmem:[%s260 + $0x98] sm:$0xff]
      %v313 = vld [vmem:[%s260 + $0xa0] sm:$0x3]
      %v314 = vld [vmem:[%s260 + $0xa8] sm:$0xff]
      %v315 = vld [vmem:[%s260 + $0xb0] sm:$0xff]
      %v316 = vld [vmem:[%s260 + $0xb8] sm:$0x3]
      %v317 = vld [vmem:[%s260 + $0xc0] sm:$0xff]
      %v318 = vld [vmem:[%s260 + $0xc8] sm:$0xff]
      %v319 = vld [vmem:[%s260 + $0xd0] sm:$0x3]
      %v320 = vld [vmem:[%s260 + $0xd8] sm:$0xff]
      %v321 = vld [vmem:[%s260 + $0xe0] sm:$0xff]
      %v322 = vld [vmem:[%s260 + $0xe8] sm:$0x3]
      %v323 = vld [vmem:[%s260 + $0xf0] sm:$0xff]
      %v324 = vld [vmem:[%s260 + $0xf8] sm:$0xff]
      %v325 = vld [vmem:[%s260 + $0x100] sm:$0x3]
      %v326 = vld [vmem:[%s260 + $0x108] sm:$0xff]
      %v327 = vld [vmem:[%s260 + $0x110] sm:$0xff]
      %v328 = vld [vmem:[%s260 + $0x118] sm:$0x3]
      %v329 = vld [vmem:[%s260 + $0x120] sm:$0xff]
      %v330 = vld [vmem:[%s260 + $0x128] sm:$0xff]
      %v331 = vld [vmem:[%s260 + $0x130] sm:$0x3]
      %v332 = vld [vmem:[%s260 + $0x138] sm:$0xff]
      %v333 = vld [vmem:[%s260 + $0x140] sm:$0xff]
      %v334 = vld [vmem:[%s260 + $0x148] sm:$0x3]
      %v335 = vld [vmem:[%s260 + $0x150] sm:$0xff]
      %v336 = vld [vmem:[%s260 + $0x158] sm:$0xff]
      %v337 = vld [vmem:[%s260 + $0x160] sm:$0x3]
      %v338 = vld [vmem:[%s260 + $0x168] sm:$0xff]
      %v339 = vld [vmem:[%s260 + $0x170] sm:$0xff]
      %v340 = vld [vmem:[%s260 + $0x178] sm:$0x3]
      %v341 = vld [vmem:[%s278] sm:$0xff]
      %v342 = vld [vmem:[%s278 + $0x8] sm:$0xff]
      %v343 = vld [vmem:[%s278 + $0x10] sm:$0x3]
      %v344 = vld [vmem:[%s278 + $0x18] sm:$0xff]
      %v345 = vld [vmem:[%s278 + $0x20] sm:$0xff]
      %v346 = vld [vmem:[%s278 + $0x28] sm:$0x3]
      %v347 = vld [vmem:[%s2] sm:$0xff]
      %v348 = vld [vmem:[%s2 + $0x8] sm:$0xff]
      %v349 = vld [vmem:[%s2 + $0x10] sm:$0xff]
      %v350 = vld [vmem:[%s2 + $0x18] sm:$0xff]
      %v351 = vld [vmem:[%s2 + $0x20] sm:$0xff]
      %v352 = vld [vmem:[%s2 + $0x28] sm:$0xff]
      %vm401 = vcmask 1046528
      %v402 = vrot.slane %v293, 1
      %v403 = vrot.slane %v294, 1
      %v404 = vsel %vm401, %v402, %v403
      %v405 = vrot.slane %v295, 1
      %v406 = vsel %vm401, %v403, %v405
      %v407 = vrot.slane %v296, 1
      %v408 = vrot.slane %v297, 1
      %v409 = vsel %vm401, %v407, %v408
      %v410 = vrot.slane %v298, 1
      %v411 = vsel %vm401, %v408, %v410
      %v412 = vrot.slane %v299, 1
      %v413 = vrot.slane %v300, 1
      %v414 = vsel %vm401, %v412, %v413
      %v415 = vrot.slane %v301, 1
      %v416 = vsel %vm401, %v413, %v415
      %v417 = vrot.slane %v302, 1
      %v418 = vrot.slane %v303, 1
      %v419 = vsel %vm401, %v417, %v418
      %v420 = vrot.slane %v304, 1
      %v421 = vsel %vm401, %v418, %v420
      %v422 = vrot.slane %v305, 1
      %v423 = vrot.slane %v306, 1
      %v424 = vsel %vm401, %v422, %v423
      %v425 = vrot.slane %v307, 1
      %v426 = vsel %vm401, %v423, %v425
      %v427 = vrot.slane %v308, 1
      %v428 = vrot.slane %v309, 1
      %v429 = vsel %vm401, %v427, %v428
      %v430 = vrot.slane %v310, 1
      %v431 = vsel %vm401, %v428, %v430
      %v432 = vrot.slane %v311, 1
      %v433 = vrot.slane %v312, 1
      %v434 = vsel %vm401, %v432, %v433
      %v435 = vrot.slane %v313, 1
      %v436 = vsel %vm401, %v433, %v435
      %v437 = vrot.slane %v314, 1
      %v438 = vrot.slane %v315, 1
      %v439 = vsel %vm401, %v437, %v438
      %v440 = vrot.slane %v316, 1
      %v441 = vsel %vm401, %v438, %v440
      %v442 = vrot.slane %v317, 1
      %v443 = vrot.slane %v318, 1
      %v444 = vsel %vm401, %v442, %v443
      %v445 = vrot.slane %v319, 1
      %v446 = vsel %vm401, %v443, %v445
      %v447 = vrot.slane %v320, 1
      %v448 = vrot.slane %v321, 1
      %v449 = vsel %vm401, %v447, %v448
      %v450 = vrot.slane %v322, 1
      %v451 = vsel %vm401, %v448, %v450
      %v452 = vrot.slane %v323, 1
      %v453 = vrot.slane %v324, 1
      %v454 = vsel %vm401, %v452, %v453
      %v455 = vrot.slane %v325, 1
      %v456 = vsel %vm401, %v453, %v455
      %v457 = vrot.slane %v326, 1
      %v458 = vrot.slane %v327, 1
      %v459 = vsel %vm401, %v457, %v458
      %v460 = vrot.slane %v328, 1
      %v461 = vsel %vm401, %v458, %v460
      %v462 = vrot.slane %v329, 1
      %v463 = vrot.slane %v330, 1
      %v464 = vsel %vm401, %v462, %v463
      %v465 = vrot.slane %v331, 1
      %v466 = vsel %vm401, %v463, %v465
      %v467 = vrot.slane %v332, 1
      %v468 = vrot.slane %v333, 1
      %v469 = vsel %vm401, %v467, %v468
      %v470 = vrot.slane %v334, 1
      %v471 = vsel %vm401, %v468, %v470
      %v472 = vrot.slane %v335, 1
      %v473 = vrot.slane %v336, 1
      %v474 = vsel %vm401, %v472, %v473
      %v475 = vrot.slane %v337, 1
      %v476 = vsel %vm401, %v473, %v475
      %v477 = vrot.slane %v338, 1
      %v478 = vrot.slane %v339, 1
      %v479 = vsel %vm401, %v477, %v478
      %v480 = vrot.slane %v340, 1
      %v481 = vsel %vm401, %v478, %v480
      %s482 = scalar_lea.vmem %s2, 48
      %v483 = vld [vmem:[%s482] sm:$0xff]
      %v484 = vld [vmem:[%s482 + $0x8] sm:$0xff]
      %v485 = vld [vmem:[%s482 + $0x10] sm:$0xff]
      %v486 = vld [vmem:[%s482 + $0x18] sm:$0xff]
      %v487 = vld [vmem:[%s482 + $0x20] sm:$0xff]
      %v488 = vld [vmem:[%s482 + $0x28] sm:$0xff]
      %vm489 = vcmask 392192
      %v490 = vsel %vm489, %v404, 0
      %v492 = vsel %vm489, %v406, 0
      %v494 = vsel %vm489, %v409, 0
      %v496 = vsel %vm489, %v411, 0
      %v498 = vsel %vm489, %v414, 0
      %v500 = vsel %vm489, %v416, 0
      %v502 = vsel %vm489, %v419, 0
      %v504 = vsel %vm489, %v421, 0
      %v506 = vsel %vm489, %v424, 0
      %v508 = vsel %vm489, %v426, 0
      %v510 = vsel %vm489, %v429, 0
      %v512 = vsel %vm489, %v431, 0
      %v514 = vsel %vm489, %v434, 0
      %v516 = vsel %vm489, %v436, 0
      %v518 = vsel %vm489, %v439, 0
      %v520 = vsel %vm489, %v441, 0
      %v522 = vsel %vm489, %v444, 0
      %v524 = vsel %vm489, %v446, 0
      %v526 = vsel %vm489, %v449, 0
      %v528 = vsel %vm489, %v451, 0
      %v530 = vsel %vm489, %v454, 0
      %v532 = vsel %vm489, %v456, 0
      %v534 = vsel %vm489, %v459, 0
      %v536 = vsel %vm489, %v461, 0
      %v538 = vsel %vm489, %v464, 0
      %v540 = vsel %vm489, %v466, 0
      %v542 = vsel %vm489, %v469, 0
      %v544 = vsel %vm489, %v471, 0
      %v546 = vsel %vm489, %v474, 0
      %v548 = vsel %vm489, %v476, 0
      %v550 = vsel %vm489, %v479, 0
      %v552 = vsel %vm489, %v481, 0
      %554 = vmatpush.msra.mxu0 0.0
      %555 = vmatpush.msra.mxu0 0.0
      %556 = vmatpush.msra.mxu0 0.0
      %557 = vmatpush.msra.mxu0 0.0
      %558 = vmatpush.msra.mxu0 0.0
      %559 = vmatpush.msra.mxu0 0.0
      %560 = vmatpush.msra.mxu0 0.0
      %561 = vmatpush.msra.mxu0 0.0
      %562 = vmatpush.msra.mxu0 0.0
      %563 = vmatpush.msra.mxu0 0.0
      %564 = vmatpush.msra.mxu0 %v488
      %565 = vmatpush.msra.mxu0 %v487
      %566 = vmatpush.msra.mxu0 %v486
      %567 = vmatpush.msra.mxu0 %v485
      %568 = vmatpush.msra.mxu0 %v484
      %569 = vmatpush.msra.mxu0 %v483
      %570 = vmatmul.f32.gmra.mxu0 %v490
      %v571 = vpop.f32.mrf.mxu0
      %v572 = vadd.f32 0.0, %v571
      %573 = vmatmul.f32.gmra.mxu0 %v492
      %v574 = vpop.f32.mrf.mxu0
      %v575 = vadd.f32 0.0, %v574
      %576 = vmatmul.f32.gmra.mxu0 %v494
      %v577 = vpop.f32.mrf.mxu0
      %v578 = vadd.f32 0.0, %v577
      %579 = vmatmul.f32.gmra.mxu0 %v496
      %v580 = vpop.f32.mrf.mxu0
      %v581 = vadd.f32 0.0, %v580
      %582 = vmatmul.f32.gmra.mxu0 %v498
      %v583 = vpop.f32.mrf.mxu0
      %v584 = vadd.f32 0.0, %v583
      %585 = vmatmul.f32.gmra.mxu0 %v500
      %v586 = vpop.f32.mrf.mxu0
      %v587 = vadd.f32 0.0, %v586
      %588 = vmatmul.f32.gmra.mxu0 %v502
      %v589 = vpop.f32.mrf.mxu0
      %v590 = vadd.f32 0.0, %v589
      %591 = vmatmul.f32.gmra.mxu0 %v504
      %v592 = vpop.f32.mrf.mxu0
      %v593 = vadd.f32 0.0, %v592
      %594 = vmatmul.f32.gmra.mxu0 %v506
      %v595 = vpop.f32.mrf.mxu0
      %v596 = vadd.f32 0.0, %v595
      %597 = vmatmul.f32.gmra.mxu0 %v508
      %v598 = vpop.f32.mrf.mxu0
      %v599 = vadd.f32 0.0, %v598
      %600 = vmatmul.f32.gmra.mxu0 %v510
      %v601 = vpop.f32.mrf.mxu0
      %v602 = vadd.f32 0.0, %v601
      %603 = vmatmul.f32.gmra.mxu0 %v512
      %v604 = vpop.f32.mrf.mxu0
      %v605 = vadd.f32 0.0, %v604
      %606 = vmatmul.f32.gmra.mxu0 %v514
      %v607 = vpop.f32.mrf.mxu0
      %v608 = vadd.f32 0.0, %v607
      %609 = vmatmul.f32.gmra.mxu0 %v516
      %v610 = vpop.f32.mrf.mxu0
      %v611 = vadd.f32 0.0, %v610
      %612 = vmatmul.f32.gmra.mxu0 %v518
      %v613 = vpop.f32.mrf.mxu0
      %v614 = vadd.f32 0.0, %v613
      %615 = vmatmul.f32.gmra.mxu0 %v520
      %v616 = vpop.f32.mrf.mxu0
      %v617 = vadd.f32 0.0, %v616
      %618 = vmatmul.f32.gmra.mxu0 %v522
      %v619 = vpop.f32.mrf.mxu0
      %v620 = vadd.f32 0.0, %v619
      %621 = vmatmul.f32.gmra.mxu0 %v524
      %v622 = vpop.f32.mrf.mxu0
      %v623 = vadd.f32 0.0, %v622
      %624 = vmatmul.f32.gmra.mxu0 %v526
      %v625 = vpop.f32.mrf.mxu0
      %v626 = vadd.f32 0.0, %v625
      %627 = vmatmul.f32.gmra.mxu0 %v528
      %v628 = vpop.f32.mrf.mxu0
      %v629 = vadd.f32 0.0, %v628
      %630 = vmatmul.f32.gmra.mxu0 %v530
      %v631 = vpop.f32.mrf.mxu0
      %v632 = vadd.f32 0.0, %v631
      %633 = vmatmul.f32.gmra.mxu0 %v532
      %v634 = vpop.f32.mrf.mxu0
      %v635 = vadd.f32 0.0, %v634
      %636 = vmatmul.f32.gmra.mxu0 %v534
      %v637 = vpop.f32.mrf.mxu0
      %v638 = vadd.f32 0.0, %v637
      %639 = vmatmul.f32.gmra.mxu0 %v536
      %v640 = vpop.f32.mrf.mxu0
      %v641 = vadd.f32 0.0, %v640
      %642 = vmatmul.f32.gmra.mxu0 %v538
      %v643 = vpop.f32.mrf.mxu0
      %v644 = vadd.f32 0.0, %v643
      %645 = vmatmul.f32.gmra.mxu0 %v540
      %v646 = vpop.f32.mrf.mxu0
      %v647 = vadd.f32 0.0, %v646
      %648 = vmatmul.f32.gmra.mxu0 %v542
      %v649 = vpop.f32.mrf.mxu0
      %v650 = vadd.f32 0.0, %v649
      %651 = vmatmul.f32.gmra.mxu0 %v544
      %v652 = vpop.f32.mrf.mxu0
      %v653 = vadd.f32 0.0, %v652
      %654 = vmatmul.f32.gmra.mxu0 %v546
      %v655 = vpop.f32.mrf.mxu0
      %v656 = vadd.f32 0.0, %v655
      %657 = vmatmul.f32.gmra.mxu0 %v548
      %v658 = vpop.f32.mrf.mxu0
      %v659 = vadd.f32 0.0, %v658
      %660 = vmatmul.f32.gmra.mxu0 %v550
      %v661 = vpop.f32.mrf.mxu0
      %v662 = vadd.f32 0.0, %v661
      %663 = vmatmul.f32.gmra.mxu0 %v552
      %v664 = vpop.f32.mrf.mxu0
      %v665 = vadd.f32 0.0, %v664
      %666 = vdwg.mxu0
      %v667 = vsel %vm489, %v293, 0
      %v669 = vsel %vm489, %v294, 0
      %v671 = vsel %vm489, %v296, 0
      %v673 = vsel %vm489, %v297, 0
      %v675 = vsel %vm489, %v299, 0
      %v677 = vsel %vm489, %v300, 0
      %v679 = vsel %vm489, %v302, 0
      %v681 = vsel %vm489, %v303, 0
      %v683 = vsel %vm489, %v305, 0
      %v685 = vsel %vm489, %v306, 0
      %v687 = vsel %vm489, %v308, 0
      %v689 = vsel %vm489, %v309, 0
      %v691 = vsel %vm489, %v311, 0
      %v693 = vsel %vm489, %v312, 0
      %v695 = vsel %vm489, %v314, 0
      %v697 = vsel %vm489, %v315, 0
      %v699 = vsel %vm489, %v317, 0
      %v701 = vsel %vm489, %v318, 0
      %v703 = vsel %vm489, %v320, 0
      %v705 = vsel %vm489, %v321, 0
      %v707 = vsel %vm489, %v323, 0
      %v709 = vsel %vm489, %v324, 0
      %v711 = vsel %vm489, %v326, 0
      %v713 = vsel %vm489, %v327, 0
      %v715 = vsel %vm489, %v329, 0
      %v717 = vsel %vm489, %v330, 0
      %v719 = vsel %vm489, %v332, 0
      %v721 = vsel %vm489, %v333, 0
      %v723 = vsel %vm489, %v335, 0
      %v725 = vsel %vm489, %v336, 0
      %v727 = vsel %vm489, %v338, 0
      %v729 = vsel %vm489, %v339, 0
      %731 = vmatpush.msra.mxu0 0.0
      %732 = vmatpush.msra.mxu0 0.0
      %733 = vmatpush.msra.mxu0 0.0
      %734 = vmatpush.msra.mxu0 0.0
      %735 = vmatpush.msra.mxu0 0.0
      %736 = vmatpush.msra.mxu0 0.0
      %737 = vmatpush.msra.mxu0 0.0
      %738 = vmatpush.msra.mxu0 0.0
      %739 = vmatpush.msra.mxu0 0.0
      %740 = vmatpush.msra.mxu0 0.0
      %741 = vmatpush.msra.mxu0 %v352
      %742 = vmatpush.msra.mxu0 %v351
      %743 = vmatpush.msra.mxu0 %v350
      %744 = vmatpush.msra.mxu0 %v349
      %745 = vmatpush.msra.mxu0 %v348
      %746 = vmatpush.msra.mxu0 %v347
      %747 = vmatmul.f32.gmra.mxu0 %v667
      %v748 = vpop.f32.mrf.mxu0
      %v749 = vadd.f32 %v572, %v748
      %750 = vmatmul.f32.gmra.mxu0 %v669
      %v751 = vpop.f32.mrf.mxu0
      %v752 = vadd.f32 %v575, %v751
      %753 = vmatmul.f32.gmra.mxu0 %v671
      %v754 = vpop.f32.mrf.mxu0
      %v755 = vadd.f32 %v578, %v754
      %756 = vmatmul.f32.gmra.mxu0 %v673
      %v757 = vpop.f32.mrf.mxu0
      %v758 = vadd.f32 %v581, %v757
      %759 = vmatmul.f32.gmra.mxu0 %v675
      %v760 = vpop.f32.mrf.mxu0
      %v761 = vadd.f32 %v584, %v760
      %762 = vmatmul.f32.gmra.mxu0 %v677
      %v763 = vpop.f32.mrf.mxu0
      %v764 = vadd.f32 %v587, %v763
      %765 = vmatmul.f32.gmra.mxu0 %v679
      %v766 = vpop.f32.mrf.mxu0
      %v767 = vadd.f32 %v590, %v766
      %768 = vmatmul.f32.gmra.mxu0 %v681
      %v769 = vpop.f32.mrf.mxu0
      %v770 = vadd.f32 %v593, %v769
      %771 = vmatmul.f32.gmra.mxu0 %v683
      %v772 = vpop.f32.mrf.mxu0
      %v773 = vadd.f32 %v596, %v772
      %774 = vmatmul.f32.gmra.mxu0 %v685
      %v775 = vpop.f32.mrf.mxu0
      %v776 = vadd.f32 %v599, %v775
      %777 = vmatmul.f32.gmra.mxu0 %v687
      %v778 = vpop.f32.mrf.mxu0
      %v779 = vadd.f32 %v602, %v778
      %780 = vmatmul.f32.gmra.mxu0 %v689
      %v781 = vpop.f32.mrf.mxu0
      %v782 = vadd.f32 %v605, %v781
      %783 = vmatmul.f32.gmra.mxu0 %v691
      %v784 = vpop.f32.mrf.mxu0
      %v785 = vadd.f32 %v608, %v784
      %786 = vmatmul.f32.gmra.mxu0 %v693
      %v787 = vpop.f32.mrf.mxu0
      %v788 = vadd.f32 %v611, %v787
      %789 = vmatmul.f32.gmra.mxu0 %v695
      %v790 = vpop.f32.mrf.mxu0
      %v791 = vadd.f32 %v614, %v790
      %792 = vmatmul.f32.gmra.mxu0 %v697
      %v793 = vpop.f32.mrf.mxu0
      %v794 = vadd.f32 %v617, %v793
      %795 = vmatmul.f32.gmra.mxu0 %v699
      %v796 = vpop.f32.mrf.mxu0
      %v797 = vadd.f32 %v620, %v796
      %798 = vmatmul.f32.gmra.mxu0 %v701
      %v799 = vpop.f32.mrf.mxu0
      %v800 = vadd.f32 %v623, %v799
      %801 = vmatmul.f32.gmra.mxu0 %v703
      %v802 = vpop.f32.mrf.mxu0
      %v803 = vadd.f32 %v626, %v802
      %804 = vmatmul.f32.gmra.mxu0 %v705
      %v805 = vpop.f32.mrf.mxu0
      %v806 = vadd.f32 %v629, %v805
      %807 = vmatmul.f32.gmra.mxu0 %v707
      %v808 = vpop.f32.mrf.mxu0
      %v809 = vadd.f32 %v632, %v808
      %810 = vmatmul.f32.gmra.mxu0 %v709
      %v811 = vpop.f32.mrf.mxu0
      %v812 = vadd.f32 %v635, %v811
      %813 = vmatmul.f32.gmra.mxu0 %v711
      %v814 = vpop.f32.mrf.mxu0
      %v815 = vadd.f32 %v638, %v814
      %816 = vmatmul.f32.gmra.mxu0 %v713
      %v817 = vpop.f32.mrf.mxu0
      %v818 = vadd.f32 %v641, %v817
      %819 = vmatmul.f32.gmra.mxu0 %v715
      %v820 = vpop.f32.mrf.mxu0
      %v821 = vadd.f32 %v644, %v820
      %822 = vmatmul.f32.gmra.mxu0 %v717
      %v823 = vpop.f32.mrf.mxu0
      %v824 = vadd.f32 %v647, %v823
      %825 = vmatmul.f32.gmra.mxu0 %v719
      %v826 = vpop.f32.mrf.mxu0
      %v827 = vadd.f32 %v650, %v826
      %828 = vmatmul.f32.gmra.mxu0 %v721
      %v829 = vpop.f32.mrf.mxu0
      %v830 = vadd.f32 %v653, %v829
      %831 = vmatmul.f32.gmra.mxu0 %v723
      %v832 = vpop.f32.mrf.mxu0
      %v833 = vadd.f32 %v656, %v832
      %834 = vmatmul.f32.gmra.mxu0 %v725
      %v835 = vpop.f32.mrf.mxu0
      %v836 = vadd.f32 %v659, %v835
      %837 = vmatmul.f32.gmra.mxu0 %v727
      %v838 = vpop.f32.mrf.mxu0
      %v839 = vadd.f32 %v662, %v838
      %840 = vmatmul.f32.gmra.mxu0 %v729
      %v841 = vpop.f32.mrf.mxu0
      %v842 = vadd.f32 %v665, %v841
      %843 = vdwg.mxu0
      %vm844 = vcmask 1045504
      %v845 = vrot.slane %v293, 2
      %v846 = vrot.slane %v294, 2
      %v847 = vsel %vm844, %v845, %v846
      %v848 = vrot.slane %v295, 2
      %v849 = vsel %vm844, %v846, %v848
      %v850 = vrot.slane %v296, 2
      %v851 = vrot.slane %v297, 2
      %v852 = vsel %vm844, %v850, %v851
      %v853 = vrot.slane %v298, 2
      %v854 = vsel %vm844, %v851, %v853
      %v855 = vrot.slane %v299, 2
      %v856 = vrot.slane %v300, 2
      %v857 = vsel %vm844, %v855, %v856
      %v858 = vrot.slane %v301, 2
      %v859 = vsel %vm844, %v856, %v858
      %v860 = vrot.slane %v302, 2
      %v861 = vrot.slane %v303, 2
      %v862 = vsel %vm844, %v860, %v861
      %v863 = vrot.slane %v304, 2
      %v864 = vsel %vm844, %v861, %v863
      %v865 = vrot.slane %v305, 2
      %v866 = vrot.slane %v306, 2
      %v867 = vsel %vm844, %v865, %v866
      %v868 = vrot.slane %v307, 2
      %v869 = vsel %vm844, %v866, %v868
      %v870 = vrot.slane %v308, 2
      %v871 = vrot.slane %v309, 2
      %v872 = vsel %vm844, %v870, %v871
      %v873 = vrot.slane %v310, 2
      %v874 = vsel %vm844, %v871, %v873
      %v875 = vrot.slane %v311, 2
      %v876 = vrot.slane %v312, 2
      %v877 = vsel %vm844, %v875, %v876
      %v878 = vrot.slane %v313, 2
      %v879 = vsel %vm844, %v876, %v878
      %v880 = vrot.slane %v314, 2
      %v881 = vrot.slane %v315, 2
      %v882 = vsel %vm844, %v880, %v881
      %v883 = vrot.slane %v316, 2
      %v884 = vsel %vm844, %v881, %v883
      %v885 = vrot.slane %v317, 2
      %v886 = vrot.slane %v318, 2
      %v887 = vsel %vm844, %v885, %v886
      %v888 = vrot.slane %v319, 2
      %v889 = vsel %vm844, %v886, %v888
      %v890 = vrot.slane %v320, 2
      %v891 = vrot.slane %v321, 2
      %v892 = vsel %vm844, %v890, %v891
      %v893 = vrot.slane %v322, 2
      %v894 = vsel %vm844, %v891, %v893
      %v895 = vrot.slane %v323, 2
      %v896 = vrot.slane %v324, 2
      %v897 = vsel %vm844, %v895, %v896
      %v898 = vrot.slane %v325, 2
      %v899 = vsel %vm844, %v896, %v898
      %v900 = vrot.slane %v326, 2
      %v901 = vrot.slane %v327, 2
      %v902 = vsel %vm844, %v900, %v901
      %v903 = vrot.slane %v328, 2
      %v904 = vsel %vm844, %v901, %v903
      %v905 = vrot.slane %v329, 2
      %v906 = vrot.slane %v330, 2
      %v907 = vsel %vm844, %v905, %v906
      %v908 = vrot.slane %v331, 2
      %v909 = vsel %vm844, %v906, %v908
      %v910 = vrot.slane %v332, 2
      %v911 = vrot.slane %v333, 2
      %v912 = vsel %vm844, %v910, %v911
      %v913 = vrot.slane %v334, 2
      %v914 = vsel %vm844, %v911, %v913
      %v915 = vrot.slane %v335, 2
      %v916 = vrot.slane %v336, 2
      %v917 = vsel %vm844, %v915, %v916
      %v918 = vrot.slane %v337, 2
      %v919 = vsel %vm844, %v916, %v918
      %v920 = vrot.slane %v338, 2
      %v921 = vrot.slane %v339, 2
      %v922 = vsel %vm844, %v920, %v921
      %v923 = vrot.slane %v340, 2
      %v924 = vsel %vm844, %v921, %v923
      %s925 = scalar_lea.vmem %s2, 96
      %v926 = vld [vmem:[%s925] sm:$0xff]
      %v927 = vld [vmem:[%s925 + $0x8] sm:$0xff]
      %v928 = vld [vmem:[%s925 + $0x10] sm:$0xff]
      %v929 = vld [vmem:[%s925 + $0x18] sm:$0xff]
      %v930 = vld [vmem:[%s925 + $0x20] sm:$0xff]
      %v931 = vld [vmem:[%s925 + $0x28] sm:$0xff]
      %v932 = vsel %vm489, %v847, 0
      %v934 = vsel %vm489, %v849, 0
      %v936 = vsel %vm489, %v852, 0
      %v938 = vsel %vm489, %v854, 0
      %v940 = vsel %vm489, %v857, 0
      %v942 = vsel %vm489, %v859, 0
      %v944 = vsel %vm489, %v862, 0
      %v946 = vsel %vm489, %v864, 0
      %v948 = vsel %vm489, %v867, 0
      %v950 = vsel %vm489, %v869, 0
      %v952 = vsel %vm489, %v872, 0
      %v954 = vsel %vm489, %v874, 0
      %v956 = vsel %vm489, %v877, 0
      %v958 = vsel %vm489, %v879, 0
      %v960 = vsel %vm489, %v882, 0
      %v962 = vsel %vm489, %v884, 0
      %v964 = vsel %vm489, %v887, 0
      %v966 = vsel %vm489, %v889, 0
      %v968 = vsel %vm489, %v892, 0
      %v970 = vsel %vm489, %v894, 0
      %v972 = vsel %vm489, %v897, 0
      %v974 = vsel %vm489, %v899, 0
      %v976 = vsel %vm489, %v902, 0
      %v978 = vsel %vm489, %v904, 0
      %v980 = vsel %vm489, %v907, 0
      %v982 = vsel %vm489, %v909, 0
      %v984 = vsel %vm489, %v912, 0
      %v986 = vsel %vm489, %v914, 0
      %v988 = vsel %vm489, %v917, 0
      %v990 = vsel %vm489, %v919, 0
      %v992 = vsel %vm489, %v922, 0
      %v994 = vsel %vm489, %v924, 0
      %996 = vmatpush.msra.mxu0 0.0
      %997 = vmatpush.msra.mxu0 0.0
      %998 = vmatpush.msra.mxu0 0.0
      %999 = vmatpush.msra.mxu0 0.0
      %1000 = vmatpush.msra.mxu0 0.0
      %1001 = vmatpush.msra.mxu0 0.0
      %1002 = vmatpush.msra.mxu0 0.0
      %1003 = vmatpush.msra.mxu0 0.0
      %1004 = vmatpush.msra.mxu0 0.0
      %1005 = vmatpush.msra.mxu0 0.0
      %1006 = vmatpush.msra.mxu0 %v931
      %1007 = vmatpush.msra.mxu0 %v930
      %1008 = vmatpush.msra.mxu0 %v929
      %1009 = vmatpush.msra.mxu0 %v928
      %1010 = vmatpush.msra.mxu0 %v927
      %1011 = vmatpush.msra.mxu0 %v926
      %1012 = vmatmul.f32.gmra.mxu0 %v932
      %v1013 = vpop.f32.mrf.mxu0
      %v1014 = vadd.f32 0.0, %v1013
      %1015 = vmatmul.f32.gmra.mxu0 %v934
      %v1016 = vpop.f32.mrf.mxu0
      %v1017 = vadd.f32 0.0, %v1016
      %1018 = vmatmul.f32.gmra.mxu0 %v936
      %v1019 = vpop.f32.mrf.mxu0
      %v1020 = vadd.f32 0.0, %v1019
      %1021 = vmatmul.f32.gmra.mxu0 %v938
      %v1022 = vpop.f32.mrf.mxu0
      %v1023 = vadd.f32 0.0, %v1022
      %1024 = vmatmul.f32.gmra.mxu0 %v940
      %v1025 = vpop.f32.mrf.mxu0
      %v1026 = vadd.f32 0.0, %v1025
      %1027 = vmatmul.f32.gmra.mxu0 %v942
      %v1028 = vpop.f32.mrf.mxu0
      %v1029 = vadd.f32 0.0, %v1028
      %1030 = vmatmul.f32.gmra.mxu0 %v944
      %v1031 = vpop.f32.mrf.mxu0
      %v1032 = vadd.f32 0.0, %v1031
      %1033 = vmatmul.f32.gmra.mxu0 %v946
      %v1034 = vpop.f32.mrf.mxu0
      %v1035 = vadd.f32 0.0, %v1034
      %1036 = vmatmul.f32.gmra.mxu0 %v948
      %v1037 = vpop.f32.mrf.mxu0
      %v1038 = vadd.f32 0.0, %v1037
      %1039 = vmatmul.f32.gmra.mxu0 %v950
      %v1040 = vpop.f32.mrf.mxu0
      %v1041 = vadd.f32 0.0, %v1040
      %1042 = vmatmul.f32.gmra.mxu0 %v952
      %v1043 = vpop.f32.mrf.mxu0
      %v1044 = vadd.f32 0.0, %v1043
      %1045 = vmatmul.f32.gmra.mxu0 %v954
      %v1046 = vpop.f32.mrf.mxu0
      %v1047 = vadd.f32 0.0, %v1046
      %1048 = vmatmul.f32.gmra.mxu0 %v956
      %v1049 = vpop.f32.mrf.mxu0
      %v1050 = vadd.f32 0.0, %v1049
      %1051 = vmatmul.f32.gmra.mxu0 %v958
      %v1052 = vpop.f32.mrf.mxu0
      %v1053 = vadd.f32 0.0, %v1052
      %1054 = vmatmul.f32.gmra.mxu0 %v960
      %v1055 = vpop.f32.mrf.mxu0
      %v1056 = vadd.f32 0.0, %v1055
      %1057 = vmatmul.f32.gmra.mxu0 %v962
      %v1058 = vpop.f32.mrf.mxu0
      %v1059 = vadd.f32 0.0, %v1058
      %1060 = vmatmul.f32.gmra.mxu0 %v964
      %v1061 = vpop.f32.mrf.mxu0
      %v1062 = vadd.f32 0.0, %v1061
      %1063 = vmatmul.f32.gmra.mxu0 %v966
      %v1064 = vpop.f32.mrf.mxu0
      %v1065 = vadd.f32 0.0, %v1064
      %1066 = vmatmul.f32.gmra.mxu0 %v968
      %v1067 = vpop.f32.mrf.mxu0
      %v1068 = vadd.f32 0.0, %v1067
      %1069 = vmatmul.f32.gmra.mxu0 %v970
      %v1070 = vpop.f32.mrf.mxu0
      %v1071 = vadd.f32 0.0, %v1070
      %1072 = vmatmul.f32.gmra.mxu0 %v972
      %v1073 = vpop.f32.mrf.mxu0
      %v1074 = vadd.f32 0.0, %v1073
      %1075 = vmatmul.f32.gmra.mxu0 %v974
      %v1076 = vpop.f32.mrf.mxu0
      %v1077 = vadd.f32 0.0, %v1076
      %1078 = vmatmul.f32.gmra.mxu0 %v976
      %v1079 = vpop.f32.mrf.mxu0
      %v1080 = vadd.f32 0.0, %v1079
      %1081 = vmatmul.f32.gmra.mxu0 %v978
      %v1082 = vpop.f32.mrf.mxu0
      %v1083 = vadd.f32 0.0, %v1082
      %1084 = vmatmul.f32.gmra.mxu0 %v980
      %v1085 = vpop.f32.mrf.mxu0
      %v1086 = vadd.f32 0.0, %v1085
      %1087 = vmatmul.f32.gmra.mxu0 %v982
      %v1088 = vpop.f32.mrf.mxu0
      %v1089 = vadd.f32 0.0, %v1088
      %1090 = vmatmul.f32.gmra.mxu0 %v984
      %v1091 = vpop.f32.mrf.mxu0
      %v1092 = vadd.f32 0.0, %v1091
      %1093 = vmatmul.f32.gmra.mxu0 %v986
      %v1094 = vpop.f32.mrf.mxu0
      %v1095 = vadd.f32 0.0, %v1094
      %1096 = vmatmul.f32.gmra.mxu0 %v988
      %v1097 = vpop.f32.mrf.mxu0
      %v1098 = vadd.f32 0.0, %v1097
      %1099 = vmatmul.f32.gmra.mxu0 %v990
      %v1100 = vpop.f32.mrf.mxu0
      %v1101 = vadd.f32 0.0, %v1100
      %1102 = vmatmul.f32.gmra.mxu0 %v992
      %v1103 = vpop.f32.mrf.mxu0
      %v1104 = vadd.f32 0.0, %v1103
      %1105 = vmatmul.f32.gmra.mxu0 %v994
      %v1106 = vpop.f32.mrf.mxu0
      %v1107 = vadd.f32 0.0, %v1106
      %1108 = vdwg.mxu0
      %v1109 = vadd.f32 %v749, %v1014
      %v1110 = vadd.f32 %v752, %v1017
      %v1111 = vadd.f32 %v755, %v1020
      %v1112 = vadd.f32 %v758, %v1023
      %v1113 = vadd.f32 %v761, %v1026
      %v1114 = vadd.f32 %v764, %v1029
      %v1115 = vadd.f32 %v767, %v1032
      %v1116 = vadd.f32 %v770, %v1035
      %v1117 = vadd.f32 %v773, %v1038
      %v1118 = vadd.f32 %v776, %v1041
      %v1119 = vadd.f32 %v779, %v1044
      %v1120 = vadd.f32 %v782, %v1047
      %v1121 = vadd.f32 %v785, %v1050
      %v1122 = vadd.f32 %v788, %v1053
      %v1123 = vadd.f32 %v791, %v1056
      %v1124 = vadd.f32 %v794, %v1059
      %v1125 = vadd.f32 %v797, %v1062
      %v1126 = vadd.f32 %v800, %v1065
      %v1127 = vadd.f32 %v803, %v1068
      %v1128 = vadd.f32 %v806, %v1071
      %v1129 = vadd.f32 %v809, %v1074
      %v1130 = vadd.f32 %v812, %v1077
      %v1131 = vadd.f32 %v815, %v1080
      %v1132 = vadd.f32 %v818, %v1083
      %v1133 = vadd.f32 %v821, %v1086
      %v1134 = vadd.f32 %v824, %v1089
      %v1135 = vadd.f32 %v827, %v1092
      %v1136 = vadd.f32 %v830, %v1095
      %v1137 = vadd.f32 %v833, %v1098
      %v1138 = vadd.f32 %v836, %v1101
      %v1139 = vadd.f32 %v839, %v1104
      %v1140 = vadd.f32 %v842, %v1107
      %s1141 = scalar_lea.vmem %s2, 144
      %v1142 = vld [vmem:[%s1141] sm:$0xff]
      %v1143 = vld [vmem:[%s1141 + $0x8] sm:$0xff]
      %v1144 = vld [vmem:[%s1141 + $0x10] sm:$0xff]
      %v1145 = vld [vmem:[%s1141 + $0x18] sm:$0xff]
      %v1146 = vld [vmem:[%s1141 + $0x20] sm:$0xff]
      %v1147 = vld [vmem:[%s1141 + $0x28] sm:$0xff]
      %v1149 = vsel %vm489, %v341, 0
      %v1152 = vsel %vm489, %v342, 0
      %1154 = vmatpush.msra.mxu0 0.0
      %1155 = vmatpush.msra.mxu0 0.0
      %1156 = vmatpush.msra.mxu0 0.0
      %1157 = vmatpush.msra.mxu0 0.0
      %1158 = vmatpush.msra.mxu0 0.0
      %1159 = vmatpush.msra.mxu0 0.0
      %1160 = vmatpush.msra.mxu0 0.0
      %1161 = vmatpush.msra.mxu0 0.0
      %1162 = vmatpush.msra.mxu0 0.0
      %1163 = vmatpush.msra.mxu0 0.0
      %1164 = vmatpush.msra.mxu0 %v1147
      %1165 = vmatpush.msra.mxu0 %v1146
      %1166 = vmatpush.msra.mxu0 %v1145
      %1167 = vmatpush.msra.mxu0 %v1144
      %1168 = vmatpush.msra.mxu0 %v1143
      %1169 = vmatpush.msra.mxu0 %v1142
      %1170 = vmatmul.f32.gmra.mxu0 %v671
      %v1171 = vpop.f32.mrf.mxu0
      %v1172 = vadd.f32 0.0, %v1171
      %1173 = vmatmul.f32.gmra.mxu0 %v673
      %v1174 = vpop.f32.mrf.mxu0
      %v1175 = vadd.f32 0.0, %v1174
      %1176 = vmatmul.f32.gmra.mxu0 %v675
      %v1177 = vpop.f32.mrf.mxu0
      %v1178 = vadd.f32 0.0, %v1177
      %1179 = vmatmul.f32.gmra.mxu0 %v677
      %v1180 = vpop.f32.mrf.mxu0
      %v1181 = vadd.f32 0.0, %v1180
      %1182 = vmatmul.f32.gmra.mxu0 %v679
      %v1183 = vpop.f32.mrf.mxu0
      %v1184 = vadd.f32 0.0, %v1183
      %1185 = vmatmul.f32.gmra.mxu0 %v681
      %v1186 = vpop.f32.mrf.mxu0
      %v1187 = vadd.f32 0.0, %v1186
      %1188 = vmatmul.f32.gmra.mxu0 %v683
      %v1189 = vpop.f32.mrf.mxu0
      %v1190 = vadd.f32 0.0, %v1189
      %1191 = vmatmul.f32.gmra.mxu0 %v685
      %v1192 = vpop.f32.mrf.mxu0
      %v1193 = vadd.f32 0.0, %v1192
      %1194 = vmatmul.f32.gmra.mxu0 %v687
      %v1195 = vpop.f32.mrf.mxu0
      %v1196 = vadd.f32 0.0, %v1195
      %1197 = vmatmul.f32.gmra.mxu0 %v689
      %v1198 = vpop.f32.mrf.mxu0
      %v1199 = vadd.f32 0.0, %v1198
      %1200 = vmatmul.f32.gmra.mxu0 %v691
      %v1201 = vpop.f32.mrf.mxu0
      %v1202 = vadd.f32 0.0, %v1201
      %1203 = vmatmul.f32.gmra.mxu0 %v693
      %v1204 = vpop.f32.mrf.mxu0
      %v1205 = vadd.f32 0.0, %v1204
      %1206 = vmatmul.f32.gmra.mxu0 %v695
      %v1207 = vpop.f32.mrf.mxu0
      %v1208 = vadd.f32 0.0, %v1207
      %1209 = vmatmul.f32.gmra.mxu0 %v697
      %v1210 = vpop.f32.mrf.mxu0
      %v1211 = vadd.f32 0.0, %v1210
      %1212 = vmatmul.f32.gmra.mxu0 %v699
      %v1213 = vpop.f32.mrf.mxu0
      %v1214 = vadd.f32 0.0, %v1213
      %1215 = vmatmul.f32.gmra.mxu0 %v701
      %v1216 = vpop.f32.mrf.mxu0
      %v1217 = vadd.f32 0.0, %v1216
      %1218 = vmatmul.f32.gmra.mxu0 %v703
      %v1219 = vpop.f32.mrf.mxu0
      %v1220 = vadd.f32 0.0, %v1219
      %1221 = vmatmul.f32.gmra.mxu0 %v705
      %v1222 = vpop.f32.mrf.mxu0
      %v1223 = vadd.f32 0.0, %v1222
      %1224 = vmatmul.f32.gmra.mxu0 %v707
      %v1225 = vpop.f32.mrf.mxu0
      %v1226 = vadd.f32 0.0, %v1225
      %1227 = vmatmul.f32.gmra.mxu0 %v709
      %v1228 = vpop.f32.mrf.mxu0
      %v1229 = vadd.f32 0.0, %v1228
      %1230 = vmatmul.f32.gmra.mxu0 %v711
      %v1231 = vpop.f32.mrf.mxu0
      %v1232 = vadd.f32 0.0, %v1231
      %1233 = vmatmul.f32.gmra.mxu0 %v713
      %v1234 = vpop.f32.mrf.mxu0
      %v1235 = vadd.f32 0.0, %v1234
      %1236 = vmatmul.f32.gmra.mxu0 %v715
      %v1237 = vpop.f32.mrf.mxu0
      %v1238 = vadd.f32 0.0, %v1237
      %1239 = vmatmul.f32.gmra.mxu0 %v717
      %v1240 = vpop.f32.mrf.mxu0
      %v1241 = vadd.f32 0.0, %v1240
      %1242 = vmatmul.f32.gmra.mxu0 %v719
      %v1243 = vpop.f32.mrf.mxu0
      %v1244 = vadd.f32 0.0, %v1243
      %1245 = vmatmul.f32.gmra.mxu0 %v721
      %v1246 = vpop.f32.mrf.mxu0
      %v1247 = vadd.f32 0.0, %v1246
      %1248 = vmatmul.f32.gmra.mxu0 %v723
      %v1249 = vpop.f32.mrf.mxu0
      %v1250 = vadd.f32 0.0, %v1249
      %1251 = vmatmul.f32.gmra.mxu0 %v725
      %v1252 = vpop.f32.mrf.mxu0
      %v1253 = vadd.f32 0.0, %v1252
      %1254 = vmatmul.f32.gmra.mxu0 %v727
      %v1255 = vpop.f32.mrf.mxu0
      %v1256 = vadd.f32 0.0, %v1255
      %1257 = vmatmul.f32.gmra.mxu0 %v729
      %v1258 = vpop.f32.mrf.mxu0
      %v1259 = vadd.f32 0.0, %v1258
      %1260 = vmatmul.f32.gmra.mxu0 %v1149
      %v1261 = vpop.f32.mrf.mxu0
      %v1262 = vadd.f32 0.0, %v1261
      %1263 = vmatmul.f32.gmra.mxu0 %v1152
      %v1264 = vpop.f32.mrf.mxu0
      %v1265 = vadd.f32 0.0, %v1264
      %1266 = vdwg.mxu0
      %v1267 = vadd.f32 %v1109, %v1172
      %v1268 = vadd.f32 %v1110, %v1175
      %v1269 = vadd.f32 %v1111, %v1178
      %v1270 = vadd.f32 %v1112, %v1181
      %v1271 = vadd.f32 %v1113, %v1184
      %v1272 = vadd.f32 %v1114, %v1187
      %v1273 = vadd.f32 %v1115, %v1190
      %v1274 = vadd.f32 %v1116, %v1193
      %v1275 = vadd.f32 %v1117, %v1196
      %v1276 = vadd.f32 %v1118, %v1199
      %v1277 = vadd.f32 %v1119, %v1202
      %v1278 = vadd.f32 %v1120, %v1205
      %v1279 = vadd.f32 %v1121, %v1208
      %v1280 = vadd.f32 %v1122, %v1211
      %v1281 = vadd.f32 %v1123, %v1214
      %v1282 = vadd.f32 %v1124, %v1217
      %v1283 = vadd.f32 %v1125, %v1220
      %v1284 = vadd.f32 %v1126, %v1223
      %v1285 = vadd.f32 %v1127, %v1226
      %v1286 = vadd.f32 %v1128, %v1229
      %v1287 = vadd.f32 %v1129, %v1232
      %v1288 = vadd.f32 %v1130, %v1235
      %v1289 = vadd.f32 %v1131, %v1238
      %v1290 = vadd.f32 %v1132, %v1241
      %v1291 = vadd.f32 %v1133, %v1244
      %v1292 = vadd.f32 %v1134, %v1247
      %v1293 = vadd.f32 %v1135, %v1250
      %v1294 = vadd.f32 %v1136, %v1253
      %v1295 = vadd.f32 %v1137, %v1256
      %v1296 = vadd.f32 %v1138, %v1259
      %v1297 = vadd.f32 %v1139, %v1262
      %v1298 = vadd.f32 %v1140, %v1265
      %v1300 = vrot.slane %v341, 1
      %v1301 = vrot.slane %v342, 1
      %v1302 = vsel %vm401, %v1300, %v1301
      %v1303 = vrot.slane %v343, 1
      %v1304 = vsel %vm401, %v1301, %v1303
      %s1305 = scalar_lea.vmem %s2, 192
      %v1306 = vld [vmem:[%s1305] sm:$0xff]
      %v1307 = vld [vmem:[%s1305 + $0x8] sm:$0xff]
      %v1308 = vld [vmem:[%s1305 + $0x10] sm:$0xff]
      %v1309 = vld [vmem:[%s1305 + $0x18] sm:$0xff]
      %v1310 = vld [vmem:[%s1305 + $0x20] sm:$0xff]
      %v1311 = vld [vmem:[%s1305 + $0x28] sm:$0xff]
      %v1312 = vsel %vm489, %v1302, 0
      %v1314 = vsel %vm489, %v1304, 0
      %1316 = vmatpush.msra.mxu0 0.0
      %1317 = vmatpush.msra.mxu0 0.0
      %1318 = vmatpush.msra.mxu0 0.0
      %1319 = vmatpush.msra.mxu0 0.0
      %1320 = vmatpush.msra.mxu0 0.0
      %1321 = vmatpush.msra.mxu0 0.0
      %1322 = vmatpush.msra.mxu0 0.0
      %1323 = vmatpush.msra.mxu0 0.0
      %1324 = vmatpush.msra.mxu0 0.0
      %1325 = vmatpush.msra.mxu0 0.0
      %1326 = vmatpush.msra.mxu0 %v1311
      %1327 = vmatpush.msra.mxu0 %v1310
      %1328 = vmatpush.msra.mxu0 %v1309
      %1329 = vmatpush.msra.mxu0 %v1308
      %1330 = vmatpush.msra.mxu0 %v1307
      %1331 = vmatpush.msra.mxu0 %v1306
      %1332 = vmatmul.f32.gmra.mxu0 %v494
      %v1333 = vpop.f32.mrf.mxu0
      %v1334 = vadd.f32 0.0, %v1333
      %1335 = vmatmul.f32.gmra.mxu0 %v496
      %v1336 = vpop.f32.mrf.mxu0
      %v1337 = vadd.f32 0.0, %v1336
      %1338 = vmatmul.f32.gmra.mxu0 %v498
      %v1339 = vpop.f32.mrf.mxu0
      %v1340 = vadd.f32 0.0, %v1339
      %1341 = vmatmul.f32.gmra.mxu0 %v500
      %v1342 = vpop.f32.mrf.mxu0
      %v1343 = vadd.f32 0.0, %v1342
      %1344 = vmatmul.f32.gmra.mxu0 %v502
      %v1345 = vpop.f32.mrf.mxu0
      %v1346 = vadd.f32 0.0, %v1345
      %1347 = vmatmul.f32.gmra.mxu0 %v504
      %v1348 = vpop.f32.mrf.mxu0
      %v1349 = vadd.f32 0.0, %v1348
      %1350 = vmatmul.f32.gmra.mxu0 %v506
      %v1351 = vpop.f32.mrf.mxu0
      %v1352 = vadd.f32 0.0, %v1351
      %1353 = vmatmul.f32.gmra.mxu0 %v508
      %v1354 = vpop.f32.mrf.mxu0
      %v1355 = vadd.f32 0.0, %v1354
      %1356 = vmatmul.f32.gmra.mxu0 %v510
      %v1357 = vpop.f32.mrf.mxu0
      %v1358 = vadd.f32 0.0, %v1357
      %1359 = vmatmul.f32.gmra.mxu0 %v512
      %v1360 = vpop.f32.mrf.mxu0
      %v1361 = vadd.f32 0.0, %v1360
      %1362 = vmatmul.f32.gmra.mxu0 %v514
      %v1363 = vpop.f32.mrf.mxu0
      %v1364 = vadd.f32 0.0, %v1363
      %1365 = vmatmul.f32.gmra.mxu0 %v516
      %v1366 = vpop.f32.mrf.mxu0
      %v1367 = vadd.f32 0.0, %v1366
      %1368 = vmatmul.f32.gmra.mxu0 %v518
      %v1369 = vpop.f32.mrf.mxu0
      %v1370 = vadd.f32 0.0, %v1369
      %1371 = vmatmul.f32.gmra.mxu0 %v520
      %v1372 = vpop.f32.mrf.mxu0
      %v1373 = vadd.f32 0.0, %v1372
      %1374 = vmatmul.f32.gmra.mxu0 %v522
      %v1375 = vpop.f32.mrf.mxu0
      %v1376 = vadd.f32 0.0, %v1375
      %1377 = vmatmul.f32.gmra.mxu0 %v524
      %v1378 = vpop.f32.mrf.mxu0
      %v1379 = vadd.f32 0.0, %v1378
      %1380 = vmatmul.f32.gmra.mxu0 %v526
      %v1381 = vpop.f32.mrf.mxu0
      %v1382 = vadd.f32 0.0, %v1381
      %1383 = vmatmul.f32.gmra.mxu0 %v528
      %v1384 = vpop.f32.mrf.mxu0
      %v1385 = vadd.f32 0.0, %v1384
      %1386 = vmatmul.f32.gmra.mxu0 %v530
      %v1387 = vpop.f32.mrf.mxu0
      %v1388 = vadd.f32 0.0, %v1387
      %1389 = vmatmul.f32.gmra.mxu0 %v532
      %v1390 = vpop.f32.mrf.mxu0
      %v1391 = vadd.f32 0.0, %v1390
      %1392 = vmatmul.f32.gmra.mxu0 %v534
      %v1393 = vpop.f32.mrf.mxu0
      %v1394 = vadd.f32 0.0, %v1393
      %1395 = vmatmul.f32.gmra.mxu0 %v536
      %v1396 = vpop.f32.mrf.mxu0
      %v1397 = vadd.f32 0.0, %v1396
      %1398 = vmatmul.f32.gmra.mxu0 %v538
      %v1399 = vpop.f32.mrf.mxu0
      %v1400 = vadd.f32 0.0, %v1399
      %1401 = vmatmul.f32.gmra.mxu0 %v540
      %v1402 = vpop.f32.mrf.mxu0
      %v1403 = vadd.f32 0.0, %v1402
      %1404 = vmatmul.f32.gmra.mxu0 %v542
      %v1405 = vpop.f32.mrf.mxu0
      %v1406 = vadd.f32 0.0, %v1405
      %1407 = vmatmul.f32.gmra.mxu0 %v544
      %v1408 = vpop.f32.mrf.mxu0
      %v1409 = vadd.f32 0.0, %v1408
      %1410 = vmatmul.f32.gmra.mxu0 %v546
      %v1411 = vpop.f32.mrf.mxu0
      %v1412 = vadd.f32 0.0, %v1411
      %1413 = vmatmul.f32.gmra.mxu0 %v548
      %v1414 = vpop.f32.mrf.mxu0
      %v1415 = vadd.f32 0.0, %v1414
      %1416 = vmatmul.f32.gmra.mxu0 %v550
      %v1417 = vpop.f32.mrf.mxu0
      %v1418 = vadd.f32 0.0, %v1417
      %1419 = vmatmul.f32.gmra.mxu0 %v552
      %v1420 = vpop.f32.mrf.mxu0
      %v1421 = vadd.f32 0.0, %v1420
      %1422 = vmatmul.f32.gmra.mxu0 %v1312
      %v1423 = vpop.f32.mrf.mxu0
      %v1424 = vadd.f32 0.0, %v1423
      %1425 = vmatmul.f32.gmra.mxu0 %v1314
      %v1426 = vpop.f32.mrf.mxu0
      %v1427 = vadd.f32 0.0, %v1426
      %1428 = vdwg.mxu0
      %v1429 = vadd.f32 %v1267, %v1334
      %v1430 = vadd.f32 %v1268, %v1337
      %v1431 = vadd.f32 %v1269, %v1340
      %v1432 = vadd.f32 %v1270, %v1343
      %v1433 = vadd.f32 %v1271, %v1346
      %v1434 = vadd.f32 %v1272, %v1349
      %v1435 = vadd.f32 %v1273, %v1352
      %v1436 = vadd.f32 %v1274, %v1355
      %v1437 = vadd.f32 %v1275, %v1358
      %v1438 = vadd.f32 %v1276, %v1361
      %v1439 = vadd.f32 %v1277, %v1364
      %v1440 = vadd.f32 %v1278, %v1367
      %v1441 = vadd.f32 %v1279, %v1370
      %v1442 = vadd.f32 %v1280, %v1373
      %v1443 = vadd.f32 %v1281, %v1376
      %v1444 = vadd.f32 %v1282, %v1379
      %v1445 = vadd.f32 %v1283, %v1382
      %v1446 = vadd.f32 %v1284, %v1385
      %v1447 = vadd.f32 %v1285, %v1388
      %v1448 = vadd.f32 %v1286, %v1391
      %v1449 = vadd.f32 %v1287, %v1394
      %v1450 = vadd.f32 %v1288, %v1397
      %v1451 = vadd.f32 %v1289, %v1400
      %v1452 = vadd.f32 %v1290, %v1403
      %v1453 = vadd.f32 %v1291, %v1406
      %v1454 = vadd.f32 %v1292, %v1409
      %v1455 = vadd.f32 %v1293, %v1412
      %v1456 = vadd.f32 %v1294, %v1415
      %v1457 = vadd.f32 %v1295, %v1418
      %v1458 = vadd.f32 %v1296, %v1421
      %v1459 = vadd.f32 %v1297, %v1424
      %v1460 = vadd.f32 %v1298, %v1427
      %v1461 = vrot.slane %v341, 2
      %v1462 = vrot.slane %v342, 2
      %v1463 = vsel %vm844, %v1461, %v1462
      %v1464 = vrot.slane %v343, 2
      %v1465 = vsel %vm844, %v1462, %v1464
      %s1466 = scalar_lea.vmem %s2, 240
      %v1467 = vld [vmem:[%s1466] sm:$0xff]
      %v1468 = vld [vmem:[%s1466 + $0x8] sm:$0xff]
      %v1469 = vld [vmem:[%s1466 + $0x10] sm:$0xff]
      %v1470 = vld [vmem:[%s1466 + $0x18] sm:$0xff]
      %v1471 = vld [vmem:[%s1466 + $0x20] sm:$0xff]
      %v1472 = vld [vmem:[%s1466 + $0x28] sm:$0xff]
      %v1473 = vsel %vm489, %v1463, 0
      %v1475 = vsel %vm489, %v1465, 0
      %1477 = vmatpush.msra.mxu0 0.0
      %1478 = vmatpush.msra.mxu0 0.0
      %1479 = vmatpush.msra.mxu0 0.0
      %1480 = vmatpush.msra.mxu0 0.0
      %1481 = vmatpush.msra.mxu0 0.0
      %1482 = vmatpush.msra.mxu0 0.0
      %1483 = vmatpush.msra.mxu0 0.0
      %1484 = vmatpush.msra.mxu0 0.0
      %1485 = vmatpush.msra.mxu0 0.0
      %1486 = vmatpush.msra.mxu0 0.0
      %1487 = vmatpush.msra.mxu0 %v1472
      %1488 = vmatpush.msra.mxu0 %v1471
      %1489 = vmatpush.msra.mxu0 %v1470
      %1490 = vmatpush.msra.mxu0 %v1469
      %1491 = vmatpush.msra.mxu0 %v1468
      %1492 = vmatpush.msra.mxu0 %v1467
      %1493 = vmatmul.f32.gmra.mxu0 %v936
      %v1494 = vpop.f32.mrf.mxu0
      %v1495 = vadd.f32 0.0, %v1494
      %1496 = vmatmul.f32.gmra.mxu0 %v938
      %v1497 = vpop.f32.mrf.mxu0
      %v1498 = vadd.f32 0.0, %v1497
      %1499 = vmatmul.f32.gmra.mxu0 %v940
      %v1500 = vpop.f32.mrf.mxu0
      %v1501 = vadd.f32 0.0, %v1500
      %1502 = vmatmul.f32.gmra.mxu0 %v942
      %v1503 = vpop.f32.mrf.mxu0
      %v1504 = vadd.f32 0.0, %v1503
      %1505 = vmatmul.f32.gmra.mxu0 %v944
      %v1506 = vpop.f32.mrf.mxu0
      %v1507 = vadd.f32 0.0, %v1506
      %1508 = vmatmul.f32.gmra.mxu0 %v946
      %v1509 = vpop.f32.mrf.mxu0
      %v1510 = vadd.f32 0.0, %v1509
      %1511 = vmatmul.f32.gmra.mxu0 %v948
      %v1512 = vpop.f32.mrf.mxu0
      %v1513 = vadd.f32 0.0, %v1512
      %1514 = vmatmul.f32.gmra.mxu0 %v950
      %v1515 = vpop.f32.mrf.mxu0
      %v1516 = vadd.f32 0.0, %v1515
      %1517 = vmatmul.f32.gmra.mxu0 %v952
      %v1518 = vpop.f32.mrf.mxu0
      %v1519 = vadd.f32 0.0, %v1518
      %1520 = vmatmul.f32.gmra.mxu0 %v954
      %v1521 = vpop.f32.mrf.mxu0
      %v1522 = vadd.f32 0.0, %v1521
      %1523 = vmatmul.f32.gmra.mxu0 %v956
      %v1524 = vpop.f32.mrf.mxu0
      %v1525 = vadd.f32 0.0, %v1524
      %1526 = vmatmul.f32.gmra.mxu0 %v958
      %v1527 = vpop.f32.mrf.mxu0
      %v1528 = vadd.f32 0.0, %v1527
      %1529 = vmatmul.f32.gmra.mxu0 %v960
      %v1530 = vpop.f32.mrf.mxu0
      %v1531 = vadd.f32 0.0, %v1530
      %1532 = vmatmul.f32.gmra.mxu0 %v962
      %v1533 = vpop.f32.mrf.mxu0
      %v1534 = vadd.f32 0.0, %v1533
      %1535 = vmatmul.f32.gmra.mxu0 %v964
      %v1536 = vpop.f32.mrf.mxu0
      %v1537 = vadd.f32 0.0, %v1536
      %1538 = vmatmul.f32.gmra.mxu0 %v966
      %v1539 = vpop.f32.mrf.mxu0
      %v1540 = vadd.f32 0.0, %v1539
      %1541 = vmatmul.f32.gmra.mxu0 %v968
      %v1542 = vpop.f32.mrf.mxu0
      %v1543 = vadd.f32 0.0, %v1542
      %1544 = vmatmul.f32.gmra.mxu0 %v970
      %v1545 = vpop.f32.mrf.mxu0
      %v1546 = vadd.f32 0.0, %v1545
      %1547 = vmatmul.f32.gmra.mxu0 %v972
      %v1548 = vpop.f32.mrf.mxu0
      %v1549 = vadd.f32 0.0, %v1548
      %1550 = vmatmul.f32.gmra.mxu0 %v974
      %v1551 = vpop.f32.mrf.mxu0
      %v1552 = vadd.f32 0.0, %v1551
      %1553 = vmatmul.f32.gmra.mxu0 %v976
      %v1554 = vpop.f32.mrf.mxu0
      %v1555 = vadd.f32 0.0, %v1554
      %1556 = vmatmul.f32.gmra.mxu0 %v978
      %v1557 = vpop.f32.mrf.mxu0
      %v1558 = vadd.f32 0.0, %v1557
      %1559 = vmatmul.f32.gmra.mxu0 %v980
      %v1560 = vpop.f32.mrf.mxu0
      %v1561 = vadd.f32 0.0, %v1560
      %1562 = vmatmul.f32.gmra.mxu0 %v982
      %v1563 = vpop.f32.mrf.mxu0
      %v1564 = vadd.f32 0.0, %v1563
      %1565 = vmatmul.f32.gmra.mxu0 %v984
      %v1566 = vpop.f32.mrf.mxu0
      %v1567 = vadd.f32 0.0, %v1566
      %1568 = vmatmul.f32.gmra.mxu0 %v986
      %v1569 = vpop.f32.mrf.mxu0
      %v1570 = vadd.f32 0.0, %v1569
      %1571 = vmatmul.f32.gmra.mxu0 %v988
      %v1572 = vpop.f32.mrf.mxu0
      %v1573 = vadd.f32 0.0, %v1572
      %1574 = vmatmul.f32.gmra.mxu0 %v990
      %v1575 = vpop.f32.mrf.mxu0
      %v1576 = vadd.f32 0.0, %v1575
      %1577 = vmatmul.f32.gmra.mxu0 %v992
      %v1578 = vpop.f32.mrf.mxu0
      %v1579 = vadd.f32 0.0, %v1578
      %1580 = vmatmul.f32.gmra.mxu0 %v994
      %v1581 = vpop.f32.mrf.mxu0
      %v1582 = vadd.f32 0.0, %v1581
      %1583 = vmatmul.f32.gmra.mxu0 %v1473
      %v1584 = vpop.f32.mrf.mxu0
      %v1585 = vadd.f32 0.0, %v1584
      %1586 = vmatmul.f32.gmra.mxu0 %v1475
      %v1587 = vpop.f32.mrf.mxu0
      %v1588 = vadd.f32 0.0, %v1587
      %1589 = vdwg.mxu0
      %v1590 = vadd.f32 %v1429, %v1495
      %v1591 = vadd.f32 %v1430, %v1498
      %v1592 = vadd.f32 %v1431, %v1501
      %v1593 = vadd.f32 %v1432, %v1504
      %v1594 = vadd.f32 %v1433, %v1507
      %v1595 = vadd.f32 %v1434, %v1510
      %v1596 = vadd.f32 %v1435, %v1513
      %v1597 = vadd.f32 %v1436, %v1516
      %v1598 = vadd.f32 %v1437, %v1519
      %v1599 = vadd.f32 %v1438, %v1522
      %v1600 = vadd.f32 %v1439, %v1525
      %v1601 = vadd.f32 %v1440, %v1528
      %v1602 = vadd.f32 %v1441, %v1531
      %v1603 = vadd.f32 %v1442, %v1534
      %v1604 = vadd.f32 %v1443, %v1537
      %v1605 = vadd.f32 %v1444, %v1540
      %v1606 = vadd.f32 %v1445, %v1543
      %v1607 = vadd.f32 %v1446, %v1546
      %v1608 = vadd.f32 %v1447, %v1549
      %v1609 = vadd.f32 %v1448, %v1552
      %v1610 = vadd.f32 %v1449, %v1555
      %v1611 = vadd.f32 %v1450, %v1558
      %v1612 = vadd.f32 %v1451, %v1561
      %v1613 = vadd.f32 %v1452, %v1564
      %v1614 = vadd.f32 %v1453, %v1567
      %v1615 = vadd.f32 %v1454, %v1570
      %v1616 = vadd.f32 %v1455, %v1573
      %v1617 = vadd.f32 %v1456, %v1576
      %v1618 = vadd.f32 %v1457, %v1579
      %v1619 = vadd.f32 %v1458, %v1582
      %v1620 = vadd.f32 %v1459, %v1585
      %v1621 = vadd.f32 %v1460, %v1588
      %s1622 = scalar_lea.vmem %s2, 288
      %v1623 = vld [vmem:[%s1622] sm:$0xff]
      %v1624 = vld [vmem:[%s1622 + $0x8] sm:$0xff]
      %v1625 = vld [vmem:[%s1622 + $0x10] sm:$0xff]
      %v1626 = vld [vmem:[%s1622 + $0x18] sm:$0xff]
      %v1627 = vld [vmem:[%s1622 + $0x20] sm:$0xff]
      %v1628 = vld [vmem:[%s1622 + $0x28] sm:$0xff]
      %v1630 = vsel %vm489, %v344, 0
      %v1633 = vsel %vm489, %v345, 0
      %1635 = vmatpush.msra.mxu0 0.0
      %1636 = vmatpush.msra.mxu0 0.0
      %1637 = vmatpush.msra.mxu0 0.0
      %1638 = vmatpush.msra.mxu0 0.0
      %1639 = vmatpush.msra.mxu0 0.0
      %1640 = vmatpush.msra.mxu0 0.0
      %1641 = vmatpush.msra.mxu0 0.0
      %1642 = vmatpush.msra.mxu0 0.0
      %1643 = vmatpush.msra.mxu0 0.0
      %1644 = vmatpush.msra.mxu0 0.0
      %1645 = vmatpush.msra.mxu0 %v1628
      %1646 = vmatpush.msra.mxu0 %v1627
      %1647 = vmatpush.msra.mxu0 %v1626
      %1648 = vmatpush.msra.mxu0 %v1625
      %1649 = vmatpush.msra.mxu0 %v1624
      %1650 = vmatpush.msra.mxu0 %v1623
      %1651 = vmatmul.f32.gmra.mxu0 %v675
      %v1652 = vpop.f32.mrf.mxu0
      %v1653 = vadd.f32 0.0, %v1652
      %1654 = vmatmul.f32.gmra.mxu0 %v677
      %v1655 = vpop.f32.mrf.mxu0
      %v1656 = vadd.f32 0.0, %v1655
      %1657 = vmatmul.f32.gmra.mxu0 %v679
      %v1658 = vpop.f32.mrf.mxu0
      %v1659 = vadd.f32 0.0, %v1658
      %1660 = vmatmul.f32.gmra.mxu0 %v681
      %v1661 = vpop.f32.mrf.mxu0
      %v1662 = vadd.f32 0.0, %v1661
      %1663 = vmatmul.f32.gmra.mxu0 %v683
      %v1664 = vpop.f32.mrf.mxu0
      %v1665 = vadd.f32 0.0, %v1664
      %1666 = vmatmul.f32.gmra.mxu0 %v685
      %v1667 = vpop.f32.mrf.mxu0
      %v1668 = vadd.f32 0.0, %v1667
      %1669 = vmatmul.f32.gmra.mxu0 %v687
      %v1670 = vpop.f32.mrf.mxu0
      %v1671 = vadd.f32 0.0, %v1670
      %1672 = vmatmul.f32.gmra.mxu0 %v689
      %v1673 = vpop.f32.mrf.mxu0
      %v1674 = vadd.f32 0.0, %v1673
      %1675 = vmatmul.f32.gmra.mxu0 %v691
      %v1676 = vpop.f32.mrf.mxu0
      %v1677 = vadd.f32 0.0, %v1676
      %1678 = vmatmul.f32.gmra.mxu0 %v693
      %v1679 = vpop.f32.mrf.mxu0
      %v1680 = vadd.f32 0.0, %v1679
      %1681 = vmatmul.f32.gmra.mxu0 %v695
      %v1682 = vpop.f32.mrf.mxu0
      %v1683 = vadd.f32 0.0, %v1682
      %1684 = vmatmul.f32.gmra.mxu0 %v697
      %v1685 = vpop.f32.mrf.mxu0
      %v1686 = vadd.f32 0.0, %v1685
      %1687 = vmatmul.f32.gmra.mxu0 %v699
      %v1688 = vpop.f32.mrf.mxu0
      %v1689 = vadd.f32 0.0, %v1688
      %1690 = vmatmul.f32.gmra.mxu0 %v701
      %v1691 = vpop.f32.mrf.mxu0
      %v1692 = vadd.f32 0.0, %v1691
      %1693 = vmatmul.f32.gmra.mxu0 %v703
      %v1694 = vpop.f32.mrf.mxu0
      %v1695 = vadd.f32 0.0, %v1694
      %1696 = vmatmul.f32.gmra.mxu0 %v705
      %v1697 = vpop.f32.mrf.mxu0
      %v1698 = vadd.f32 0.0, %v1697
      %1699 = vmatmul.f32.gmra.mxu0 %v707
      %v1700 = vpop.f32.mrf.mxu0
      %v1701 = vadd.f32 0.0, %v1700
      %1702 = vmatmul.f32.gmra.mxu0 %v709
      %v1703 = vpop.f32.mrf.mxu0
      %v1704 = vadd.f32 0.0, %v1703
      %1705 = vmatmul.f32.gmra.mxu0 %v711
      %v1706 = vpop.f32.mrf.mxu0
      %v1707 = vadd.f32 0.0, %v1706
      %1708 = vmatmul.f32.gmra.mxu0 %v713
      %v1709 = vpop.f32.mrf.mxu0
      %v1710 = vadd.f32 0.0, %v1709
      %1711 = vmatmul.f32.gmra.mxu0 %v715
      %v1712 = vpop.f32.mrf.mxu0
      %v1713 = vadd.f32 0.0, %v1712
      %1714 = vmatmul.f32.gmra.mxu0 %v717
      %v1715 = vpop.f32.mrf.mxu0
      %v1716 = vadd.f32 0.0, %v1715
      %1717 = vmatmul.f32.gmra.mxu0 %v719
      %v1718 = vpop.f32.mrf.mxu0
      %v1719 = vadd.f32 0.0, %v1718
      %1720 = vmatmul.f32.gmra.mxu0 %v721
      %v1721 = vpop.f32.mrf.mxu0
      %v1722 = vadd.f32 0.0, %v1721
      %1723 = vmatmul.f32.gmra.mxu0 %v723
      %v1724 = vpop.f32.mrf.mxu0
      %v1725 = vadd.f32 0.0, %v1724
      %1726 = vmatmul.f32.gmra.mxu0 %v725
      %v1727 = vpop.f32.mrf.mxu0
      %v1728 = vadd.f32 0.0, %v1727
      %1729 = vmatmul.f32.gmra.mxu0 %v727
      %v1730 = vpop.f32.mrf.mxu0
      %v1731 = vadd.f32 0.0, %v1730
      %1732 = vmatmul.f32.gmra.mxu0 %v729
      %v1733 = vpop.f32.mrf.mxu0
      %v1734 = vadd.f32 0.0, %v1733
      %1735 = vmatmul.f32.gmra.mxu0 %v1149
      %v1736 = vpop.f32.mrf.mxu0
      %v1737 = vadd.f32 0.0, %v1736
      %1738 = vmatmul.f32.gmra.mxu0 %v1152
      %v1739 = vpop.f32.mrf.mxu0
      %v1740 = vadd.f32 0.0, %v1739
      %1741 = vmatmul.f32.gmra.mxu0 %v1630
      %v1742 = vpop.f32.mrf.mxu0
      %v1743 = vadd.f32 0.0, %v1742
      %1744 = vmatmul.f32.gmra.mxu0 %v1633
      %v1745 = vpop.f32.mrf.mxu0
      %v1746 = vadd.f32 0.0, %v1745
      %1747 = vdwg.mxu0
      %v1748 = vadd.f32 %v1590, %v1653
      %v1749 = vadd.f32 %v1591, %v1656
      %v1750 = vadd.f32 %v1592, %v1659
      %v1751 = vadd.f32 %v1593, %v1662
      %v1752 = vadd.f32 %v1594, %v1665
      %v1753 = vadd.f32 %v1595, %v1668
      %v1754 = vadd.f32 %v1596, %v1671
      %v1755 = vadd.f32 %v1597, %v1674
      %v1756 = vadd.f32 %v1598, %v1677
      %v1757 = vadd.f32 %v1599, %v1680
      %v1758 = vadd.f32 %v1600, %v1683
      %v1759 = vadd.f32 %v1601, %v1686
      %v1760 = vadd.f32 %v1602, %v1689
      %v1761 = vadd.f32 %v1603, %v1692
      %v1762 = vadd.f32 %v1604, %v1695
      %v1763 = vadd.f32 %v1605, %v1698
      %v1764 = vadd.f32 %v1606, %v1701
      %v1765 = vadd.f32 %v1607, %v1704
      %v1766 = vadd.f32 %v1608, %v1707
      %v1767 = vadd.f32 %v1609, %v1710
      %v1768 = vadd.f32 %v1610, %v1713
      %v1769 = vadd.f32 %v1611, %v1716
      %v1770 = vadd.f32 %v1612, %v1719
      %v1771 = vadd.f32 %v1613, %v1722
      %v1772 = vadd.f32 %v1614, %v1725
      %v1773 = vadd.f32 %v1615, %v1728
      %v1774 = vadd.f32 %v1616, %v1731
      %v1775 = vadd.f32 %v1617, %v1734
      %v1776 = vadd.f32 %v1618, %v1737
      %v1777 = vadd.f32 %v1619, %v1740
      %v1778 = vadd.f32 %v1620, %v1743
      %v1779 = vadd.f32 %v1621, %v1746
      %v1781 = vrot.slane %v344, 1
      %v1782 = vrot.slane %v345, 1
      %v1783 = vsel %vm401, %v1781, %v1782
      %v1784 = vrot.slane %v346, 1
      %v1785 = vsel %vm401, %v1782, %v1784
      %s1786 = scalar_lea.vmem %s2, 336
      %v1787 = vld [vmem:[%s1786] sm:$0xff]
      %v1788 = vld [vmem:[%s1786 + $0x8] sm:$0xff]
      %v1789 = vld [vmem:[%s1786 + $0x10] sm:$0xff]
      %v1790 = vld [vmem:[%s1786 + $0x18] sm:$0xff]
      %v1791 = vld [vmem:[%s1786 + $0x20] sm:$0xff]
      %v1792 = vld [vmem:[%s1786 + $0x28] sm:$0xff]
      %v1793 = vsel %vm489, %v1783, 0
      %v1795 = vsel %vm489, %v1785, 0
      %1797 = vmatpush.msra.mxu0 0.0
      %1798 = vmatpush.msra.mxu0 0.0
      %1799 = vmatpush.msra.mxu0 0.0
      %1800 = vmatpush.msra.mxu0 0.0
      %1801 = vmatpush.msra.mxu0 0.0
      %1802 = vmatpush.msra.mxu0 0.0
      %1803 = vmatpush.msra.mxu0 0.0
      %1804 = vmatpush.msra.mxu0 0.0
      %1805 = vmatpush.msra.mxu0 0.0
      %1806 = vmatpush.msra.mxu0 0.0
      %1807 = vmatpush.msra.mxu0 %v1792
      %1808 = vmatpush.msra.mxu0 %v1791
      %1809 = vmatpush.msra.mxu0 %v1790
      %1810 = vmatpush.msra.mxu0 %v1789
      %1811 = vmatpush.msra.mxu0 %v1788
      %1812 = vmatpush.msra.mxu0 %v1787
      %1813 = vmatmul.f32.gmra.mxu0 %v498
      %v1814 = vpop.f32.mrf.mxu0
      %v1815 = vadd.f32 0.0, %v1814
      %1816 = vmatmul.f32.gmra.mxu0 %v500
      %v1817 = vpop.f32.mrf.mxu0
      %v1818 = vadd.f32 0.0, %v1817
      %1819 = vmatmul.f32.gmra.mxu0 %v502
      %v1820 = vpop.f32.mrf.mxu0
      %v1821 = vadd.f32 0.0, %v1820
      %1822 = vmatmul.f32.gmra.mxu0 %v504
      %v1823 = vpop.f32.mrf.mxu0
      %v1824 = vadd.f32 0.0, %v1823
      %1825 = vmatmul.f32.gmra.mxu0 %v506
      %v1826 = vpop.f32.mrf.mxu0
      %v1827 = vadd.f32 0.0, %v1826
      %1828 = vmatmul.f32.gmra.mxu0 %v508
      %v1829 = vpop.f32.mrf.mxu0
      %v1830 = vadd.f32 0.0, %v1829
      %1831 = vmatmul.f32.gmra.mxu0 %v510
      %v1832 = vpop.f32.mrf.mxu0
      %v1833 = vadd.f32 0.0, %v1832
      %1834 = vmatmul.f32.gmra.mxu0 %v512
      %v1835 = vpop.f32.mrf.mxu0
      %v1836 = vadd.f32 0.0, %v1835
      %1837 = vmatmul.f32.gmra.mxu0 %v514
      %v1838 = vpop.f32.mrf.mxu0
      %v1839 = vadd.f32 0.0, %v1838
      %1840 = vmatmul.f32.gmra.mxu0 %v516
      %v1841 = vpop.f32.mrf.mxu0
      %v1842 = vadd.f32 0.0, %v1841
      %1843 = vmatmul.f32.gmra.mxu0 %v518
      %v1844 = vpop.f32.mrf.mxu0
      %v1845 = vadd.f32 0.0, %v1844
      %1846 = vmatmul.f32.gmra.mxu0 %v520
      %v1847 = vpop.f32.mrf.mxu0
      %v1848 = vadd.f32 0.0, %v1847
      %1849 = vmatmul.f32.gmra.mxu0 %v522
      %v1850 = vpop.f32.mrf.mxu0
      %v1851 = vadd.f32 0.0, %v1850
      %1852 = vmatmul.f32.gmra.mxu0 %v524
      %v1853 = vpop.f32.mrf.mxu0
      %v1854 = vadd.f32 0.0, %v1853
      %1855 = vmatmul.f32.gmra.mxu0 %v526
      %v1856 = vpop.f32.mrf.mxu0
      %v1857 = vadd.f32 0.0, %v1856
      %1858 = vmatmul.f32.gmra.mxu0 %v528
      %v1859 = vpop.f32.mrf.mxu0
      %v1860 = vadd.f32 0.0, %v1859
      %1861 = vmatmul.f32.gmra.mxu0 %v530
      %v1862 = vpop.f32.mrf.mxu0
      %v1863 = vadd.f32 0.0, %v1862
      %1864 = vmatmul.f32.gmra.mxu0 %v532
      %v1865 = vpop.f32.mrf.mxu0
      %v1866 = vadd.f32 0.0, %v1865
      %1867 = vmatmul.f32.gmra.mxu0 %v534
      %v1868 = vpop.f32.mrf.mxu0
      %v1869 = vadd.f32 0.0, %v1868
      %1870 = vmatmul.f32.gmra.mxu0 %v536
      %v1871 = vpop.f32.mrf.mxu0
      %v1872 = vadd.f32 0.0, %v1871
      %1873 = vmatmul.f32.gmra.mxu0 %v538
      %v1874 = vpop.f32.mrf.mxu0
      %v1875 = vadd.f32 0.0, %v1874
      %1876 = vmatmul.f32.gmra.mxu0 %v540
      %v1877 = vpop.f32.mrf.mxu0
      %v1878 = vadd.f32 0.0, %v1877
      %1879 = vmatmul.f32.gmra.mxu0 %v542
      %v1880 = vpop.f32.mrf.mxu0
      %v1881 = vadd.f32 0.0, %v1880
      %1882 = vmatmul.f32.gmra.mxu0 %v544
      %v1883 = vpop.f32.mrf.mxu0
      %v1884 = vadd.f32 0.0, %v1883
      %1885 = vmatmul.f32.gmra.mxu0 %v546
      %v1886 = vpop.f32.mrf.mxu0
      %v1887 = vadd.f32 0.0, %v1886
      %1888 = vmatmul.f32.gmra.mxu0 %v548
      %v1889 = vpop.f32.mrf.mxu0
      %v1890 = vadd.f32 0.0, %v1889
      %1891 = vmatmul.f32.gmra.mxu0 %v550
      %v1892 = vpop.f32.mrf.mxu0
      %v1893 = vadd.f32 0.0, %v1892
      %1894 = vmatmul.f32.gmra.mxu0 %v552
      %v1895 = vpop.f32.mrf.mxu0
      %v1896 = vadd.f32 0.0, %v1895
      %1897 = vmatmul.f32.gmra.mxu0 %v1312
      %v1898 = vpop.f32.mrf.mxu0
      %v1899 = vadd.f32 0.0, %v1898
      %1900 = vmatmul.f32.gmra.mxu0 %v1314
      %v1901 = vpop.f32.mrf.mxu0
      %v1902 = vadd.f32 0.0, %v1901
      %1903 = vmatmul.f32.gmra.mxu0 %v1793
      %v1904 = vpop.f32.mrf.mxu0
      %v1905 = vadd.f32 0.0, %v1904
      %1906 = vmatmul.f32.gmra.mxu0 %v1795
      %v1907 = vpop.f32.mrf.mxu0
      %v1908 = vadd.f32 0.0, %v1907
      %1909 = vdwg.mxu0
      %v1910 = vadd.f32 %v1748, %v1815
      %v1911 = vadd.f32 %v1749, %v1818
      %v1912 = vadd.f32 %v1750, %v1821
      %v1913 = vadd.f32 %v1751, %v1824
      %v1914 = vadd.f32 %v1752, %v1827
      %v1915 = vadd.f32 %v1753, %v1830
      %v1916 = vadd.f32 %v1754, %v1833
      %v1917 = vadd.f32 %v1755, %v1836
      %v1918 = vadd.f32 %v1756, %v1839
      %v1919 = vadd.f32 %v1757, %v1842
      %v1920 = vadd.f32 %v1758, %v1845
      %v1921 = vadd.f32 %v1759, %v1848
      %v1922 = vadd.f32 %v1760, %v1851
      %v1923 = vadd.f32 %v1761, %v1854
      %v1924 = vadd.f32 %v1762, %v1857
      %v1925 = vadd.f32 %v1763, %v1860
      %v1926 = vadd.f32 %v1764, %v1863
      %v1927 = vadd.f32 %v1765, %v1866
      %v1928 = vadd.f32 %v1766, %v1869
      %v1929 = vadd.f32 %v1767, %v1872
      %v1930 = vadd.f32 %v1768, %v1875
      %v1931 = vadd.f32 %v1769, %v1878
      %v1932 = vadd.f32 %v1770, %v1881
      %v1933 = vadd.f32 %v1771, %v1884
      %v1934 = vadd.f32 %v1772, %v1887
      %v1935 = vadd.f32 %v1773, %v1890
      %v1936 = vadd.f32 %v1774, %v1893
      %v1937 = vadd.f32 %v1775, %v1896
      %v1938 = vadd.f32 %v1776, %v1899
      %v1939 = vadd.f32 %v1777, %v1902
      %v1940 = vadd.f32 %v1778, %v1905
      %v1941 = vadd.f32 %v1779, %v1908
      %v1942 = vrot.slane %v344, 2
      %v1943 = vrot.slane %v345, 2
      %v1944 = vsel %vm844, %v1942, %v1943
      %v1945 = vrot.slane %v346, 2
      %v1946 = vsel %vm844, %v1943, %v1945
      %s1947 = scalar_lea.vmem %s2, 384
      %v1948 = vld [vmem:[%s1947] sm:$0xff]
      %v1949 = vld [vmem:[%s1947 + $0x8] sm:$0xff]
      %v1950 = vld [vmem:[%s1947 + $0x10] sm:$0xff]
      %v1951 = vld [vmem:[%s1947 + $0x18] sm:$0xff]
      %v1952 = vld [vmem:[%s1947 + $0x20] sm:$0xff]
      %v1953 = vld [vmem:[%s1947 + $0x28] sm:$0xff]
      %v1954 = vsel %vm489, %v1944, 0
      %v1956 = vsel %vm489, %v1946, 0
      %1958 = vmatpush.msra.mxu0 0.0
      %1959 = vmatpush.msra.mxu0 0.0
      %1960 = vmatpush.msra.mxu0 0.0
      %1961 = vmatpush.msra.mxu0 0.0
      %1962 = vmatpush.msra.mxu0 0.0
      %1963 = vmatpush.msra.mxu0 0.0
      %1964 = vmatpush.msra.mxu0 0.0
      %1965 = vmatpush.msra.mxu0 0.0
      %1966 = vmatpush.msra.mxu0 0.0
      %1967 = vmatpush.msra.mxu0 0.0
      %1968 = vmatpush.msra.mxu0 %v1953
      %1969 = vmatpush.msra.mxu0 %v1952
      %1970 = vmatpush.msra.mxu0 %v1951
      %1971 = vmatpush.msra.mxu0 %v1950
      %1972 = vmatpush.msra.mxu0 %v1949
      %1973 = vmatpush.msra.mxu0 %v1948
      %1974 = vmatmul.f32.gmra.mxu0 %v940
      %v1975 = vpop.f32.mrf.mxu0
      %v1976 = vadd.f32 0.0, %v1975
      %1977 = vmatmul.f32.gmra.mxu0 %v942
      %v1978 = vpop.f32.mrf.mxu0
      %v1979 = vadd.f32 0.0, %v1978
      %1980 = vmatmul.f32.gmra.mxu0 %v944
      %v1981 = vpop.f32.mrf.mxu0
      %v1982 = vadd.f32 0.0, %v1981
      %1983 = vmatmul.f32.gmra.mxu0 %v946
      %v1984 = vpop.f32.mrf.mxu0
      %v1985 = vadd.f32 0.0, %v1984
      %1986 = vmatmul.f32.gmra.mxu0 %v948
      %v1987 = vpop.f32.mrf.mxu0
      %v1988 = vadd.f32 0.0, %v1987
      %1989 = vmatmul.f32.gmra.mxu0 %v950
      %v1990 = vpop.f32.mrf.mxu0
      %v1991 = vadd.f32 0.0, %v1990
      %1992 = vmatmul.f32.gmra.mxu0 %v952
      %v1993 = vpop.f32.mrf.mxu0
      %v1994 = vadd.f32 0.0, %v1993
      %1995 = vmatmul.f32.gmra.mxu0 %v954
      %v1996 = vpop.f32.mrf.mxu0
      %v1997 = vadd.f32 0.0, %v1996
      %1998 = vmatmul.f32.gmra.mxu0 %v956
      %v1999 = vpop.f32.mrf.mxu0
      %v2000 = vadd.f32 0.0, %v1999
      %2001 = vmatmul.f32.gmra.mxu0 %v958
      %v2002 = vpop.f32.mrf.mxu0
      %v2003 = vadd.f32 0.0, %v2002
      %2004 = vmatmul.f32.gmra.mxu0 %v960
      %v2005 = vpop.f32.mrf.mxu0
      %v2006 = vadd.f32 0.0, %v2005
      %2007 = vmatmul.f32.gmra.mxu0 %v962
      %v2008 = vpop.f32.mrf.mxu0
      %v2009 = vadd.f32 0.0, %v2008
      %2010 = vmatmul.f32.gmra.mxu0 %v964
      %v2011 = vpop.f32.mrf.mxu0
      %v2012 = vadd.f32 0.0, %v2011
      %2013 = vmatmul.f32.gmra.mxu0 %v966
      %v2014 = vpop.f32.mrf.mxu0
      %v2015 = vadd.f32 0.0, %v2014
      %2016 = vmatmul.f32.gmra.mxu0 %v968
      %v2017 = vpop.f32.mrf.mxu0
      %v2018 = vadd.f32 0.0, %v2017
      %2019 = vmatmul.f32.gmra.mxu0 %v970
      %v2020 = vpop.f32.mrf.mxu0
      %v2021 = vadd.f32 0.0, %v2020
      %2022 = vmatmul.f32.gmra.mxu0 %v972
      %v2023 = vpop.f32.mrf.mxu0
      %v2024 = vadd.f32 0.0, %v2023
      %2025 = vmatmul.f32.gmra.mxu0 %v974
      %v2026 = vpop.f32.mrf.mxu0
      %v2027 = vadd.f32 0.0, %v2026
      %2028 = vmatmul.f32.gmra.mxu0 %v976
      %v2029 = vpop.f32.mrf.mxu0
      %v2030 = vadd.f32 0.0, %v2029
      %2031 = vmatmul.f32.gmra.mxu0 %v978
      %v2032 = vpop.f32.mrf.mxu0
      %v2033 = vadd.f32 0.0, %v2032
      %2034 = vmatmul.f32.gmra.mxu0 %v980
      %v2035 = vpop.f32.mrf.mxu0
      %v2036 = vadd.f32 0.0, %v2035
      %2037 = vmatmul.f32.gmra.mxu0 %v982
      %v2038 = vpop.f32.mrf.mxu0
      %v2039 = vadd.f32 0.0, %v2038
      %2040 = vmatmul.f32.gmra.mxu0 %v984
      %v2041 = vpop.f32.mrf.mxu0
      %v2042 = vadd.f32 0.0, %v2041
      %2043 = vmatmul.f32.gmra.mxu0 %v986
      %v2044 = vpop.f32.mrf.mxu0
      %v2045 = vadd.f32 0.0, %v2044
      %2046 = vmatmul.f32.gmra.mxu0 %v988
      %v2047 = vpop.f32.mrf.mxu0
      %v2048 = vadd.f32 0.0, %v2047
      %2049 = vmatmul.f32.gmra.mxu0 %v990
      %v2050 = vpop.f32.mrf.mxu0
      %v2051 = vadd.f32 0.0, %v2050
      %2052 = vmatmul.f32.gmra.mxu0 %v992
      %v2053 = vpop.f32.mrf.mxu0
      %v2054 = vadd.f32 0.0, %v2053
      %2055 = vmatmul.f32.gmra.mxu0 %v994
      %v2056 = vpop.f32.mrf.mxu0
      %v2057 = vadd.f32 0.0, %v2056
      %2058 = vmatmul.f32.gmra.mxu0 %v1473
      %v2059 = vpop.f32.mrf.mxu0
      %v2060 = vadd.f32 0.0, %v2059
      %2061 = vmatmul.f32.gmra.mxu0 %v1475
      %v2062 = vpop.f32.mrf.mxu0
      %v2063 = vadd.f32 0.0, %v2062
      %2064 = vmatmul.f32.gmra.mxu0 %v1954
      %v2065 = vpop.f32.mrf.mxu0
      %v2066 = vadd.f32 0.0, %v2065
      %2067 = vmatmul.f32.gmra.mxu0 %v1956
      %v2068 = vpop.f32.mrf.mxu0
      %v2069 = vadd.f32 0.0, %v2068
      %2070 = vdwg.mxu0
      %v2071 = vadd.f32 %v1910, %v1976
      %v2072 = vadd.f32 %v1911, %v1979
      %v2073 = vadd.f32 %v1912, %v1982
      %v2074 = vadd.f32 %v1913, %v1985
      %v2075 = vadd.f32 %v1914, %v1988
      %v2076 = vadd.f32 %v1915, %v1991
      %v2077 = vadd.f32 %v1916, %v1994
      %v2078 = vadd.f32 %v1917, %v1997
      %v2079 = vadd.f32 %v1918, %v2000
      %v2080 = vadd.f32 %v1919, %v2003
      %v2081 = vadd.f32 %v1920, %v2006
      %v2082 = vadd.f32 %v1921, %v2009
      %v2083 = vadd.f32 %v1922, %v2012
      %v2084 = vadd.f32 %v1923, %v2015
      %v2085 = vadd.f32 %v1924, %v2018
      %v2086 = vadd.f32 %v1925, %v2021
      %v2087 = vadd.f32 %v1926, %v2024
      %v2088 = vadd.f32 %v1927, %v2027
      %v2089 = vadd.f32 %v1928, %v2030
      %v2090 = vadd.f32 %v1929, %v2033
      %v2091 = vadd.f32 %v1930, %v2036
      %v2092 = vadd.f32 %v1931, %v2039
      %v2093 = vadd.f32 %v1932, %v2042
      %v2094 = vadd.f32 %v1933, %v2045
      %v2095 = vadd.f32 %v1934, %v2048
      %v2096 = vadd.f32 %v1935, %v2051
      %v2097 = vadd.f32 %v1936, %v2054
      %v2098 = vadd.f32 %v1937, %v2057
      %v2099 = vadd.f32 %v1938, %v2060
      %v2100 = vadd.f32 %v1939, %v2063
      %v2101 = vadd.f32 %v1940, %v2066
      %v2102 = vadd.f32 %v1941, %v2069
      %2103 = vst.msk [vmem:[%s291] sm:$0xff] %vm489, %v2071
      %2104 = vst.msk [vmem:[%s291 + $0x8] sm:$0xff] %vm489, %v2072
      %2105 = vst.msk [vmem:[%s291 + $0x10] sm:$0xff] %vm489, %v2073
      %2106 = vst.msk [vmem:[%s291 + $0x18] sm:$0xff] %vm489, %v2074
      %2107 = vst.msk [vmem:[%s291 + $0x20] sm:$0xff] %vm489, %v2075
      %2108 = vst.msk [vmem:[%s291 + $0x28] sm:$0xff] %vm489, %v2076
      %2109 = vst.msk [vmem:[%s291 + $0x30] sm:$0xff] %vm489, %v2077
      %2110 = vst.msk [vmem:[%s291 + $0x38] sm:$0xff] %vm489, %v2078
      %2111 = vst.msk [vmem:[%s291 + $0x40] sm:$0xff] %vm489, %v2079
      %2112 = vst.msk [vmem:[%s291 + $0x48] sm:$0xff] %vm489, %v2080
      %2113 = vst.msk [vmem:[%s291 + $0x50] sm:$0xff] %vm489, %v2081
      %2114 = vst.msk [vmem:[%s291 + $0x58] sm:$0xff] %vm489, %v2082
      %2115 = vst.msk [vmem:[%s291 + $0x60] sm:$0xff] %vm489, %v2083
      %2116 = vst.msk [vmem:[%s291 + $0x68] sm:$0xff] %vm489, %v2084
      %2117 = vst.msk [vmem:[%s291 + $0x70] sm:$0xff] %vm489, %v2085
      %2118 = vst.msk [vmem:[%s291 + $0x78] sm:$0xff] %vm489, %v2086
      %2119 = vst.msk [vmem:[%s291 + $0x80] sm:$0xff] %vm489, %v2087
      %2120 = vst.msk [vmem:[%s291 + $0x88] sm:$0xff] %vm489, %v2088
      %2121 = vst.msk [vmem:[%s291 + $0x90] sm:$0xff] %vm489, %v2089
      %2122 = vst.msk [vmem:[%s291 + $0x98] sm:$0xff] %vm489, %v2090
      %2123 = vst.msk [vmem:[%s291 + $0xa0] sm:$0xff] %vm489, %v2091
      %2124 = vst.msk [vmem:[%s291 + $0xa8] sm:$0xff] %vm489, %v2092
      %2125 = vst.msk [vmem:[%s291 + $0xb0] sm:$0xff] %vm489, %v2093
      %2126 = vst.msk [vmem:[%s291 + $0xb8] sm:$0xff] %vm489, %v2094
      %2127 = vst.msk [vmem:[%s291 + $0xc0] sm:$0xff] %vm489, %v2095
      %2128 = vst.msk [vmem:[%s291 + $0xc8] sm:$0xff] %vm489, %v2096
      %2129 = vst.msk [vmem:[%s291 + $0xd0] sm:$0xff] %vm489, %v2097
      %2130 = vst.msk [vmem:[%s291 + $0xd8] sm:$0xff] %vm489, %v2098
      %2131 = vst.msk [vmem:[%s291 + $0xe0] sm:$0xff] %vm489, %v2099
      %2132 = vst.msk [vmem:[%s291 + $0xe8] sm:$0xff] %vm489, %v2100
      %2133 = vst.msk [vmem:[%s291 + $0xf0] sm:$0xff] %vm489, %v2101
      %2134 = vst.msk [vmem:[%s291 + $0xf8] sm:$0xff] %vm489, %v2102
      %s2135 = smul.u32 16, %s19
      %p2136 = scmp.lt.s32.totalorder %s18, 1
      %s2137 = scalar_select %p2136, %s18, 1
      %p2138 = scmp.lt.s32.totalorder %s2135, 15
      %s2139 = scalar_select %p2138, %s2135, 15
      %s2140 = smul.addr %s2139, 2
      %s2141 = smul.addr %s2137, 32
      %s2142 = sadd.s32 %s2140, %s2141
      %s2143 = smul.addr %s2142, 8
      %s2144 = scalar_lea.vmem %s3, %s2143
      // Predicated region
      $region33: #{upsample_pallas.1} parent=31 // pred_check
        %p2145 = pneg %p127
      $region34: #{upsample_pallas.1} parent=31 // pred_check_branch
        %2147 = sbr.rel (%p2145) target = $region36
      $region35: #{upsample_pallas.1} parent=31 // pred_region
        %s2148 = smul.u32 16, %s19
      $region36: #{upsample_pallas.1} parent=31 // pred_fallthru
        _
    $region32: #{upsample_pallas.1} parent=5 // pred_fallthru
      _
    %p2149 = scmp.le.s32.totalorder 2, %s9
    // Predicated region
    $region37: #{upsample_pallas.1} parent=5 // pred_check
      %p2150 = pneg %p2149
    $region38: #{upsample_pallas.1} parent=5 // pred_check_branch
      %2152 = sbr.rel (%p2150) target = $region40
    $region39: #{upsample_pallas.1} parent=5 // pred_region
      %s2153 = ssub.s32 %s9, 2
      // Predicated region
      $region41: #{upsample_pallas.1} parent=39 // pred_check
        %p2154 = pneg %p133
      $region42: #{upsample_pallas.1} parent=39 // pred_check_branch
        %2156 = sbr.rel (%p2154) target = $region44
      $region43: #{upsample_pallas.1} parent=39 // pred_region
        %s2157 = smul.u32 16, %s21
        %p2158 = scmp.lt.s32.totalorder %s20, 1
        %s2159 = scalar_select %p2158, %s20, 1
        %p2160 = scmp.lt.s32.totalorder %s2157, 15
        %s2161 = scalar_select %p2160, %s2157, 15
        %s2162 = smul.addr %s2161, 2
        %s2163 = smul.addr %s2159, 32
        %s2164 = sadd.s32 %s2162, %s2163
        %s2165 = smul.addr %s2164, 8
        %s2166 = scalar_lea.vmem %s3, %s2165
      $region44: #{upsample_pallas.1} parent=39 // pred_fallthru
        _
    $region40: #{upsample_pallas.1} parent=5 // pred_fallthru
      _
  $region6: #{upsample_pallas.1} parent=0 // loop_footer
    %s13 = sadd.s32 1, %s9
  $region7: #{upsample_pallas.1} parent=0 // loop_footer_branch
    %8 = sbr.rel target = $region3
  $region8: #{upsample_pallas.1} parent=0 // loop_exit
    _

</llo_original>
